<compile_context>
chip_gen: v7x
topology: tpu7x:2x2x1
jax: 0.10.0
libtpu: 0.0.40
codegen_flags: <defaults>
</compile_context>

<pallas_src>
import numpy as np
import jax
import jax.numpy as jnp
from jax import lax
from jax.experimental import pallas as pl
from jax.experimental.pallas import tpu as pltpu

_VMEM = pl.BlockSpec(memory_space=pltpu.MemorySpace.VMEM)

LANES = 128      # every GEMM N dim is padded to one full lane tile
BSLOTS = 8       # batch slots carried through the fc head (sublane aligned)


# ------------------------------ fused kernel -------------------------------

def _fused_kernel(p1_ref, w1_ref, b1_ref, g2_ref, w2_ref, b2_ref,
                  wf1_ref, bf1_ref, wf2_ref, bf2_ref, out_ref,
                  p2_ref, hf_ref):
    f32, bf16 = jnp.float32, jnp.bfloat16

    # ---- conv1 (3x3,pad=1) + ReLU + 2x2 maxpool: ONE tap-stacked matmul ----
    # p1 rows are ordered q*(B*16)+b*16+h1*4+w1 (q = pool-window position), so
    # the maxpool is a pure elementwise VPU max over 4 contiguous row slabs.
    y1f = jnp.dot(p1_ref[...], w1_ref[...], preferred_element_type=f32)
    q = y1f.shape[0] // 4
    y1 = jnp.maximum(jnp.maximum(y1f[0:q], y1f[q:2 * q]),
                     jnp.maximum(y1f[2 * q:3 * q], y1f[3 * q:4 * q]))
    y1 = jnp.maximum(y1 + b1_ref[...], 0.0)             # (B*16, 128) f32
    y1b = y1[:, :32].astype(bf16)                       # real conv1 channels

    # ---- conv2 im2col: 9 MXU 0/1-gathers staged into one K=288 patch slab ---
    # (gather values are 0/1 and y1b is already bf16, so the bf16 store is exact)
    for t in range(9):
        g = jnp.dot(g2_ref[t], y1b, preferred_element_type=f32)   # (128, 32)
        p2_ref[:, t * 32:(t + 1) * 32] = g.astype(bf16)

    # ---- conv2 (3x3,pad=1) + ReLU + 2x2 maxpool: ONE K-stacked matmul -------
    y2f = jnp.dot(p2_ref[...], w2_ref[...], preferred_element_type=f32)
    q2 = y2f.shape[0] // 4
    y2 = jnp.maximum(jnp.maximum(y2f[0:q2], y2f[q2:2 * q2]),
                     jnp.maximum(y2f[2 * q2:3 * q2], y2f[3 * q2:4 * q2]))
    y2 = jnp.maximum(y2 + b2_ref[...], 0.0)             # (4*BSLOTS, 128), rows s*8+b
    zb = y2[:, :64].astype(bf16)                        # real conv2 channels

    # ---- fc1 + ReLU: stage 4 slabs -> (8, 256), ONE K-stacked matmul --------
    for s in range(4):
        hf_ref[:, s * 64:(s + 1) * 64] = zb[s * BSLOTS:(s + 1) * BSLOTS, :]
    h = jnp.dot(hf_ref[...], wf1_ref[...], preferred_element_type=f32)
    h = jnp.maximum(h + bf1_ref[...], 0.0)              # (8, 128)

    # ---- fc2 (N padded 2 -> 128 for a lane-dense store) ---------------------
    out = jnp.dot(h.astype(bf16), wf2_ref[...], preferred_element_type=f32)
    out_ref[...] = out + bf2_ref[...]                   # (8, 128); wrapper slices (B, 2)


# --------------------------- one-time param prep ---------------------------

def _build_conv1_patch_index(B):
    """Index table for the wrapper-side conv1 im2col (done ONCE).

    rows r = q*(B*16) + b*16 + h1*4 + w1  (conv1 output pixel (b, 2h1+py, 2w1+px))
    cols j = t*3 + ci (padded to 32); values index into flattened NCHW input,
    with out-of-range taps pointing at an appended zero slot.
    """
    zero_slot = B * 3 * 8 * 8
    idx = np.full((4 * B * 16, 32), zero_slot, np.int32)
    for q in range(4):
        py, px = divmod(q, 2)
        for b in range(B):
            for h1 in range(4):
                for w1 in range(4):
                    r = q * (B * 16) + b * 16 + h1 * 4 + w1
                    for t in range(9):
                        dy, dx = divmod(t, 3)
                        hin = 2 * h1 + py + dy - 1
                        win = 2 * w1 + px + dx - 1
                        if 0 <= hin < 8 and 0 <= win < 8:
                            for ci in range(3):
                                idx[r, t * 3 + ci] = b * 192 + ci * 64 + hin * 8 + win
    return idx


def _build_conv2_gather(B):
    """Constant 0/1 gather matrices for conv2 im2col (applied on the MXU).

    g2[t, r, i]: r = q*(4*BSLOTS) + s*BSLOTS + b  (conv2 output (b, 2hp+py, 2wp+px)),
                 i = b*16 + h1*4 + w1             (conv1 pooled-output row).
    Size is O(B) (fixed 128 rows, B*16 cols): ~72 KiB bf16 at B=2.
    """
    g2 = np.zeros((9, 16 * BSLOTS, B * 16), np.float32)
    for t in range(9):
        dy, dx = divmod(t, 3)
        for q in range(4):
            py, px = divmod(q, 2)
            for s in range(4):
                hp, wp = divmod(s, 2)
                for b in range(B):
                    r = q * (4 * BSLOTS) + s * BSLOTS + b
                    h1 = 2 * hp + py + dy - 1
                    w1 = 2 * wp + px + dx - 1
                    if 0 <= h1 < 4 and 0 <= w1 < 4:
                        g2[t, r, b * 16 + h1 * 4 + w1] = 1.0
    return g2


def prepare_params(p, B):
    """Permute / pad / K-stack weights and build gather constants ONCE."""
    assert 1 <= B <= BSLOTS
    f32, bf16 = jnp.float32, jnp.bfloat16
    idx1 = _build_conv1_patch_index(B)
    g2 = _build_conv2_gather(B)
    # conv1: rows t*3+ci (27 -> 32), cols cout (32 -> 128)
    w1 = jnp.transpose(p["conv1_w"], (2, 3, 1, 0)).reshape(27, 32)
    w1 = jnp.pad(w1, ((0, 5), (0, 96)))
    b1 = jnp.pad(p["conv1_b"], (0, 96)).reshape(1, LANES)
    # conv2: rows t*32+ci (= 288), cols cout (64 -> 128)
    w2 = jnp.transpose(p["conv2_w"], (2, 3, 1, 0)).reshape(288, 64)
    w2 = jnp.pad(w2, ((0, 0), (0, 64)))
    b2 = jnp.pad(p["conv2_b"], (0, 64)).reshape(1, LANES)
    # fc1: torch flatten index = c*4 + s  ->  K-stacked rows s*64 + c
    wf1 = jnp.transpose(p["fc1_w"].reshape(128, 64, 4), (2, 1, 0)).reshape(256, 128)
    bf1 = p["fc1_b"].reshape(1, LANES)
    # fc2: (128, 2) -> pad N to 128
    wf2 = jnp.pad(p["fc2_w"].T, ((0, 0), (0, 126)))
    bf2 = jnp.pad(p["fc2_b"], (0, 126)).reshape(1, LANES)
    return dict(
        idx1=jnp.asarray(idx1),
        w1=w1.astype(bf16), b1=b1.astype(f32),
        g2=jnp.asarray(g2, bf16), w2=w2.astype(bf16), b2=b2.astype(f32),
        wf1=wf1.astype(bf16), bf1=bf1.astype(f32),
        wf2=wf2.astype(bf16), bf2=bf2.astype(f32),
    )


# ------------------------------ forward glue -------------------------------

def proj2cnn_forward(x_nchw, prep):
    B = x_nchw.shape[0]
    # Per-forward glue: wrapper-side conv1 im2col of the tiny input via a
    # precomputed index gather (~8 KiB bf16 at B=2).
    x_flat = jnp.concatenate([x_nchw.reshape(-1), jnp.zeros((1,), x_nchw.dtype)])
    p1 = jnp.take(x_flat, prep["idx1"], axis=0).astype(jnp.bfloat16)
    out = pl.pallas_call(
        _fused_kernel,
        out_shape=jax.ShapeDtypeStruct((BSLOTS, LANES), jnp.float32),
        in_specs=[_VMEM] * 10,
        out_specs=_VMEM,
        scratch_shapes=[
            pltpu.VMEM((16 * BSLOTS, 9 * 32), jnp.bfloat16),   # conv2 patch slab
            pltpu.VMEM((BSLOTS, 256), jnp.bfloat16),           # fc1 input slab
        ],
    )(p1, prep["w1"], prep["b1"], prep["g2"], prep["w2"], prep["b2"],
      prep["wf1"], prep["bf1"], prep["wf2"], prep["bf2"])
    return out[:B, :2]


# ------------------------ precision-matched reference ----------------------

def reference_forward(x, p):
    """Pure-JAX reference with the same bf16-operand / f32-accumulate policy."""
    bf16, f32 = jnp.bfloat16, jnp.float32

    def conv(x, w, b):
        y = lax.conv_general_dilated(
            x.astype(bf16), w.astype(bf16), (1, 1), ((1, 1), (1, 1)),
            dimension_numbers=("NCHW", "OIHW", "NCHW"),
            preferred_element_type=f32)
        return y + b[None, :, None, None]

    def pool(x):
        return lax.reduce_window(x, -jnp.inf, lax.max,
                                 (1, 1, 2, 2), (1, 1, 2, 2), "VALID")

    y = pool(jnp.maximum(conv(x, p["conv1_w"], p["conv1_b"]), 0.0))
    y = pool(jnp.maximum(conv(y, p["conv2_w"], p["conv2_b"]), 0.0))
    flat = y.reshape(y.shape[0], -1)                       # torch CHW flatten
    h = jnp.maximum(jnp.dot(flat.astype(bf16), p["fc1_w"].T.astype(bf16),
                            preferred_element_type=f32) + p["fc1_b"], 0.0)
    return jnp.dot(h.astype(bf16), p["fc2_w"].T.astype(bf16),
                   preferred_element_type=f32) + p["fc2_b"]


# --------------------------------- main -------------------------------------

if __name__ == "__main__":
    key = jax.random.PRNGKey(0)
    ks = jax.random.split(key, 9)

    B, Cin, H, W = 2, 3, 8, 8   # 8x8 input -> two 2x2 pools -> 2x2, matches fc1(64*2*2)
    params = {
        "conv1_w": 0.1 * jax.random.normal(ks[0], (32, 3, 3, 3), jnp.float32),
        "conv1_b": 0.1 * jax.random.normal(ks[1], (32,), jnp.float32),
        "conv2_w": 0.1 * jax.random.normal(ks[2], (64, 32, 3, 3), jnp.float32),
        "conv2_b": 0.1 * jax.random.normal(ks[3], (64,), jnp.float32),
        "fc1_w":   0.1 * jax.random.normal(ks[4], (128, 64 * 2 * 2), jnp.float32),
        "fc1_b":   0.1 * jax.random.normal(ks[5], (128,), jnp.float32),
        "fc2_w":   0.1 * jax.random.normal(ks[6], (2, 128), jnp.float32),
        "fc2_b":   0.1 * jax.random.normal(ks[7], (2,), jnp.float32),
    }
    x = jax.random.normal(ks[8], (B, Cin, H, W), jnp.float32)

    prep = prepare_params(params, B)                   # one-time weight/gather prep
    fwd = jax.jit(proj2cnn_forward)

    out = jax.block_until_ready(fwd(x, prep))
    ref = jax.block_until_ready(reference_forward(x, params))

    assert out.shape == (B, 2), out.shape
    assert jnp.allclose(out, ref, atol=1e-2, rtol=1e-2), (out, ref)
    print("KERNEL_OK")
</pallas_src>

<mosaic_0001>
module attributes {stable_mosaic.version = 11 : i64} {
  func.func @_fused_kernel(%arg0: memref<128x32xbf16, #tpu.memory_space<vmem>>, %arg1: memref<32x128xbf16, #tpu.memory_space<vmem>>, %arg2: memref<1x128xf32, #tpu.memory_space<vmem>>, %arg3: memref<9x128x32xbf16, #tpu.memory_space<vmem>>, %arg4: memref<288x128xbf16, #tpu.memory_space<vmem>>, %arg5: memref<1x128xf32, #tpu.memory_space<vmem>>, %arg6: memref<256x128xbf16, #tpu.memory_space<vmem>>, %arg7: memref<1x128xf32, #tpu.memory_space<vmem>>, %arg8: memref<128x128xbf16, #tpu.memory_space<vmem>>, %arg9: memref<1x128xf32, #tpu.memory_space<vmem>>, %arg10: memref<8x128xf32, #tpu.memory_space<vmem>>, %arg11: memref<128x288xbf16, #tpu.memory_space<vmem>>, %arg12: memref<8x256xbf16, #tpu.memory_space<vmem>>) attributes {dimension_semantics = [], scalar_prefetch = 0 : i64, scratch_operands = 2 : i64, tpu.core_type = #tpu.core_type<tc>} {
    %c0 = arith.constant 0 : index
    %c0_0 = arith.constant 0 : index
    %0 = vector.load %arg0[%c0, %c0_0] : memref<128x32xbf16, #tpu.memory_space<vmem>>, vector<128x32xbf16>
    %c0_1 = arith.constant 0 : index
    %c0_2 = arith.constant 0 : index
    %1 = vector.load %arg1[%c0_1, %c0_2] : memref<32x128xbf16, #tpu.memory_space<vmem>>, vector<32x128xbf16>
    %cst = arith.constant dense<0.000000e+00> : vector<128x128xf32>
    %2 = tpu.matmul %0, %1, %cst {dimension_numbers = #tpu.dot_dimension_numbers<[1], [0], [0], [1], [0, 0, 1, 1], [], []>} : vector<128x32xbf16>, vector<32x128xbf16>, vector<128x128xf32> -> vector<128x128xf32>
    %3 = vector.extract_strided_slice %2 {offsets = [0, 0], sizes = [32, 128], strides = [1, 1]} : vector<128x128xf32> to vector<32x128xf32>
    %4 = vector.extract_strided_slice %2 {offsets = [32, 0], sizes = [32, 128], strides = [1, 1]} : vector<128x128xf32> to vector<32x128xf32>
    %5 = arith.maximumf %3, %4 : vector<32x128xf32>
    %6 = vector.extract_strided_slice %2 {offsets = [64, 0], sizes = [32, 128], strides = [1, 1]} : vector<128x128xf32> to vector<32x128xf32>
    %7 = vector.extract_strided_slice %2 {offsets = [96, 0], sizes = [32, 128], strides = [1, 1]} : vector<128x128xf32> to vector<32x128xf32>
    %8 = arith.maximumf %6, %7 : vector<32x128xf32>
    %9 = arith.maximumf %5, %8 : vector<32x128xf32>
    %c0_3 = arith.constant 0 : index
    %c0_4 = arith.constant 0 : index
    %10 = vector.load %arg2[%c0_3, %c0_4] : memref<1x128xf32, #tpu.memory_space<vmem>>, vector<1x128xf32>
    %11 = vector.broadcast %10 : vector<1x128xf32> to vector<32x128xf32>
    %12 = arith.addf %9, %11 : vector<32x128xf32>
    %cst_5 = arith.constant 0.000000e+00 : f32
    %13 = vector.broadcast %cst_5 : f32 to vector<32x128xf32>
    %14 = arith.maximumf %12, %13 : vector<32x128xf32>
    %15 = vector.extract_strided_slice %14 {offsets = [0, 0], sizes = [32, 32], strides = [1, 1]} : vector<32x128xf32> to vector<32x32xf32>
    %16 = arith.truncf %15 : vector<32x32xf32> to vector<32x32xbf16>
    %c0_6 = arith.constant 0 : index
    %c0_7 = arith.constant 0 : index
    %c0_8 = arith.constant 0 : index
    %17 = vector.load %arg3[%c0_6, %c0_7, %c0_8] : memref<9x128x32xbf16, #tpu.memory_space<vmem>>, vector<1x128x32xbf16>
    %18 = vector.shape_cast %17 : vector<1x128x32xbf16> to vector<128x32xbf16>
    %cst_9 = arith.constant dense<0.000000e+00> : vector<128x32xf32>
    %19 = tpu.matmul %18, %16, %cst_9 {dimension_numbers = #tpu.dot_dimension_numbers<[1], [0], [0], [1], [0, 0, 1, 1], [], []>} : vector<128x32xbf16>, vector<32x32xbf16>, vector<128x32xf32> -> vector<128x32xf32>
    %20 = arith.truncf %19 : vector<128x32xf32> to vector<128x32xbf16>
    %c0_10 = arith.constant 0 : index
    %c0_11 = arith.constant 0 : index
    %21 = vector.load %arg11[%c0_10, %c0_11] : memref<128x288xbf16, #tpu.memory_space<vmem>>, vector<128x32xbf16>
    tpu.vector_store %arg11[%c0_10, %c0_11], %20 {strides = array<i32>} : memref<128x288xbf16, #tpu.memory_space<vmem>>, vector<128x32xbf16>,
    %c1 = arith.constant 1 : index
    %c0_12 = arith.constant 0 : index
    %c0_13 = arith.constant 0 : index
    %22 = vector.load %arg3[%c1, %c0_12, %c0_13] : memref<9x128x32xbf16, #tpu.memory_space<vmem>>, vector<1x128x32xbf16>
    %23 = vector.shape_cast %22 : vector<1x128x32xbf16> to vector<128x32xbf16>
    %cst_14 = arith.constant dense<0.000000e+00> : vector<128x32xf32>
    %24 = tpu.matmul %23, %16, %cst_14 {dimension_numbers = #tpu.dot_dimension_numbers<[1], [0], [0], [1], [0, 0, 1, 1], [], []>} : vector<128x32xbf16>, vector<32x32xbf16>, vector<128x32xf32> -> vector<128x32xf32>
    %25 = arith.truncf %24 : vector<128x32xf32> to vector<128x32xbf16>
    %c0_15 = arith.constant 0 : index
    %c32 = arith.constant 32 : index
    %26 = vector.load %arg11[%c0_15, %c32] : memref<128x288xbf16, #tpu.memory_space<vmem>>, vector<128x32xbf16>
    tpu.vector_store %arg11[%c0_15, %c32], %25 {strides = array<i32>} : memref<128x288xbf16, #tpu.memory_space<vmem>>, vector<128x32xbf16>,
    %c2 = arith.constant 2 : index
    %c0_16 = arith.constant 0 : index
    %c0_17 = arith.constant 0 : index
    %27 = vector.load %arg3[%c2, %c0_16, %c0_17] : memref<9x128x32xbf16, #tpu.memory_space<vmem>>, vector<1x128x32xbf16>
    %28 = vector.shape_cast %27 : vector<1x128x32xbf16> to vector<128x32xbf16>
    %cst_18 = arith.constant dense<0.000000e+00> : vector<128x32xf32>
    %29 = tpu.matmul %28, %16, %cst_18 {dimension_numbers = #tpu.dot_dimension_numbers<[1], [0], [0], [1], [0, 0, 1, 1], [], []>} : vector<128x32xbf16>, vector<32x32xbf16>, vector<128x32xf32> -> vector<128x32xf32>
    %30 = arith.truncf %29 : vector<128x32xf32> to vector<128x32xbf16>
    %c0_19 = arith.constant 0 : index
    %c64 = arith.constant 64 : index
    %31 = vector.load %arg11[%c0_19, %c64] : memref<128x288xbf16, #tpu.memory_space<vmem>>, vector<128x32xbf16>
    tpu.vector_store %arg11[%c0_19, %c64], %30 {strides = array<i32>} : memref<128x288xbf16, #tpu.memory_space<vmem>>, vector<128x32xbf16>,
    %c3 = arith.constant 3 : index
    %c0_20 = arith.constant 0 : index
    %c0_21 = arith.constant 0 : index
    %32 = vector.load %arg3[%c3, %c0_20, %c0_21] : memref<9x128x32xbf16, #tpu.memory_space<vmem>>, vector<1x128x32xbf16>
    %33 = vector.shape_cast %32 : vector<1x128x32xbf16> to vector<128x32xbf16>
    %cst_22 = arith.constant dense<0.000000e+00> : vector<128x32xf32>
    %34 = tpu.matmul %33, %16, %cst_22 {dimension_numbers = #tpu.dot_dimension_numbers<[1], [0], [0], [1], [0, 0, 1, 1], [], []>} : vector<128x32xbf16>, vector<32x32xbf16>, vector<128x32xf32> -> vector<128x32xf32>
    %35 = arith.truncf %34 : vector<128x32xf32> to vector<128x32xbf16>
    %c0_23 = arith.constant 0 : index
    %c96 = arith.constant 96 : index
    %36 = vector.load %arg11[%c0_23, %c96] : memref<128x288xbf16, #tpu.memory_space<vmem>>, vector<128x32xbf16>
    tpu.vector_store %arg11[%c0_23, %c96], %35 {strides = array<i32>} : memref<128x288xbf16, #tpu.memory_space<vmem>>, vector<128x32xbf16>,
    %c4 = arith.constant 4 : index
    %c0_24 = arith.constant 0 : index
    %c0_25 = arith.constant 0 : index
    %37 = vector.load %arg3[%c4, %c0_24, %c0_25] : memref<9x128x32xbf16, #tpu.memory_space<vmem>>, vector<1x128x32xbf16>
    %38 = vector.shape_cast %37 : vector<1x128x32xbf16> to vector<128x32xbf16>
    %cst_26 = arith.constant dense<0.000000e+00> : vector<128x32xf32>
    %39 = tpu.matmul %38, %16, %cst_26 {dimension_numbers = #tpu.dot_dimension_numbers<[1], [0], [0], [1], [0, 0, 1, 1], [], []>} : vector<128x32xbf16>, vector<32x32xbf16>, vector<128x32xf32> -> vector<128x32xf32>
    %40 = arith.truncf %39 : vector<128x32xf32> to vector<128x32xbf16>
    %c0_27 = arith.constant 0 : index
    %c128 = arith.constant 128 : index
    %41 = vector.load %arg11[%c0_27, %c128] : memref<128x288xbf16, #tpu.memory_space<vmem>>, vector<128x32xbf16>
    tpu.vector_store %arg11[%c0_27, %c128], %40 {strides = array<i32>} : memref<128x288xbf16, #tpu.memory_space<vmem>>, vector<128x32xbf16>,
    %c5 = arith.constant 5 : index
    %c0_28 = arith.constant 0 : index
    %c0_29 = arith.constant 0 : index
    %42 = vector.load %arg3[%c5, %c0_28, %c0_29] : memref<9x128x32xbf16, #tpu.memory_space<vmem>>, vector<1x128x32xbf16>
    %43 = vector.shape_cast %42 : vector<1x128x32xbf16> to vector<128x32xbf16>
    %cst_30 = arith.constant dense<0.000000e+00> : vector<128x32xf32>
    %44 = tpu.matmul %43, %16, %cst_30 {dimension_numbers = #tpu.dot_dimension_numbers<[1], [0], [0], [1], [0, 0, 1, 1], [], []>} : vector<128x32xbf16>, vector<32x32xbf16>, vector<128x32xf32> -> vector<128x32xf32>
    %45 = arith.truncf %44 : vector<128x32xf32> to vector<128x32xbf16>
    %c0_31 = arith.constant 0 : index
    %c160 = arith.constant 160 : index
    %46 = vector.load %arg11[%c0_31, %c160] : memref<128x288xbf16, #tpu.memory_space<vmem>>, vector<128x32xbf16>
    tpu.vector_store %arg11[%c0_31, %c160], %45 {strides = array<i32>} : memref<128x288xbf16, #tpu.memory_space<vmem>>, vector<128x32xbf16>,
    %c6 = arith.constant 6 : index
    %c0_32 = arith.constant 0 : index
    %c0_33 = arith.constant 0 : index
    %47 = vector.load %arg3[%c6, %c0_32, %c0_33] : memref<9x128x32xbf16, #tpu.memory_space<vmem>>, vector<1x128x32xbf16>
    %48 = vector.shape_cast %47 : vector<1x128x32xbf16> to vector<128x32xbf16>
    %cst_34 = arith.constant dense<0.000000e+00> : vector<128x32xf32>
    %49 = tpu.matmul %48, %16, %cst_34 {dimension_numbers = #tpu.dot_dimension_numbers<[1], [0], [0], [1], [0, 0, 1, 1], [], []>} : vector<128x32xbf16>, vector<32x32xbf16>, vector<128x32xf32> -> vector<128x32xf32>
    %50 = arith.truncf %49 : vector<128x32xf32> to vector<128x32xbf16>
    %c0_35 = arith.constant 0 : index
    %c192 = arith.constant 192 : index
    %51 = vector.load %arg11[%c0_35, %c192] : memref<128x288xbf16, #tpu.memory_space<vmem>>, vector<128x32xbf16>
    tpu.vector_store %arg11[%c0_35, %c192], %50 {strides = array<i32>} : memref<128x288xbf16, #tpu.memory_space<vmem>>, vector<128x32xbf16>,
    %c7 = arith.constant 7 : index
    %c0_36 = arith.constant 0 : index
    %c0_37 = arith.constant 0 : index
    %52 = vector.load %arg3[%c7, %c0_36, %c0_37] : memref<9x128x32xbf16, #tpu.memory_space<vmem>>, vector<1x128x32xbf16>
    %53 = vector.shape_cast %52 : vector<1x128x32xbf16> to vector<128x32xbf16>
    %cst_38 = arith.constant dense<0.000000e+00> : vector<128x32xf32>
    %54 = tpu.matmul %53, %16, %cst_38 {dimension_numbers = #tpu.dot_dimension_numbers<[1], [0], [0], [1], [0, 0, 1, 1], [], []>} : vector<128x32xbf16>, vector<32x32xbf16>, vector<128x32xf32> -> vector<128x32xf32>
    %55 = arith.truncf %54 : vector<128x32xf32> to vector<128x32xbf16>
    %c0_39 = arith.constant 0 : index
    %c224 = arith.constant 224 : index
    %56 = vector.load %arg11[%c0_39, %c224] : memref<128x288xbf16, #tpu.memory_space<vmem>>, vector<128x32xbf16>
    tpu.vector_store %arg11[%c0_39, %c224], %55 {strides = array<i32>} : memref<128x288xbf16, #tpu.memory_space<vmem>>, vector<128x32xbf16>,
    %c8 = arith.constant 8 : index
    %c0_40 = arith.constant 0 : index
    %c0_41 = arith.constant 0 : index
    %57 = vector.load %arg3[%c8, %c0_40, %c0_41] : memref<9x128x32xbf16, #tpu.memory_space<vmem>>, vector<1x128x32xbf16>
    %58 = vector.shape_cast %57 : vector<1x128x32xbf16> to vector<128x32xbf16>
    %cst_42 = arith.constant dense<0.000000e+00> : vector<128x32xf32>
    %59 = tpu.matmul %58, %16, %cst_42 {dimension_numbers = #tpu.dot_dimension_numbers<[1], [0], [0], [1], [0, 0, 1, 1], [], []>} : vector<128x32xbf16>, vector<32x32xbf16>, vector<128x32xf32> -> vector<128x32xf32>
    %60 = arith.truncf %59 : vector<128x32xf32> to vector<128x32xbf16>
    %c0_43 = arith.constant 0 : index
    %c256 = arith.constant 256 : index
    %61 = vector.load %arg11[%c0_43, %c256] : memref<128x288xbf16, #tpu.memory_space<vmem>>, vector<128x32xbf16>
    tpu.vector_store %arg11[%c0_43, %c256], %60 {strides = array<i32>} : memref<128x288xbf16, #tpu.memory_space<vmem>>, vector<128x32xbf16>,
    %c0_44 = arith.constant 0 : index
    %c0_45 = arith.constant 0 : index
    %62 = vector.load %arg11[%c0_44, %c0_45] : memref<128x288xbf16, #tpu.memory_space<vmem>>, vector<128x288xbf16>
    %c0_46 = arith.constant 0 : index
    %c0_47 = arith.constant 0 : index
    %63 = vector.load %arg4[%c0_46, %c0_47] : memref<288x128xbf16, #tpu.memory_space<vmem>>, vector<288x128xbf16>
    %cst_48 = arith.constant dense<0.000000e+00> : vector<128x128xf32>
    %64 = tpu.matmul %62, %63, %cst_48 {dimension_numbers = #tpu.dot_dimension_numbers<[1], [0], [0], [1], [0, 0, 1, 1], [], []>} : vector<128x288xbf16>, vector<288x128xbf16>, vector<128x128xf32> -> vector<128x128xf32>
    %65 = vector.extract_strided_slice %64 {offsets = [0, 0], sizes = [32, 128], strides = [1, 1]} : vector<128x128xf32> to vector<32x128xf32>
    %66 = vector.extract_strided_slice %64 {offsets = [32, 0], sizes = [32, 128], strides = [1, 1]} : vector<128x128xf32> to vector<32x128xf32>
    %67 = arith.maximumf %65, %66 : vector<32x128xf32>
    %68 = vector.extract_strided_slice %64 {offsets = [64, 0], sizes = [32, 128], strides = [1, 1]} : vector<128x128xf32> to vector<32x128xf32>
    %69 = vector.extract_strided_slice %64 {offsets = [96, 0], sizes = [32, 128], strides = [1, 1]} : vector<128x128xf32> to vector<32x128xf32>
    %70 = arith.maximumf %68, %69 : vector<32x128xf32>
    %71 = arith.maximumf %67, %70 : vector<32x128xf32>
    %c0_49 = arith.constant 0 : index
    %c0_50 = arith.constant 0 : index
    %72 = vector.load %arg5[%c0_49, %c0_50] : memref<1x128xf32, #tpu.memory_space<vmem>>, vector<1x128xf32>
    %73 = vector.broadcast %72 : vector<1x128xf32> to vector<32x128xf32>
    %74 = arith.addf %71, %73 : vector<32x128xf32>
    %cst_51 = arith.constant 0.000000e+00 : f32
    %75 = vector.broadcast %cst_51 : f32 to vector<32x128xf32>
    %76 = arith.maximumf %74, %75 : vector<32x128xf32>
    %77 = vector.extract_strided_slice %76 {offsets = [0, 0], sizes = [32, 64], strides = [1, 1]} : vector<32x128xf32> to vector<32x64xf32>
    %78 = arith.truncf %77 : vector<32x64xf32> to vector<32x64xbf16>
    %79 = vector.extract_strided_slice %78 {offsets = [0, 0], sizes = [8, 64], strides = [1, 1]} : vector<32x64xbf16> to vector<8x64xbf16>
    %c0_52 = arith.constant 0 : index
    %c0_53 = arith.constant 0 : index
    %80 = vector.load %arg12[%c0_52, %c0_53] : memref<8x256xbf16, #tpu.memory_space<vmem>>, vector<8x64xbf16>
    tpu.vector_store %arg12[%c0_52, %c0_53], %79 {strides = array<i32>} : memref<8x256xbf16, #tpu.memory_space<vmem>>, vector<8x64xbf16>,
    %81 = vector.extract_strided_slice %78 {offsets = [8, 0], sizes = [8, 64], strides = [1, 1]} : vector<32x64xbf16> to vector<8x64xbf16>
    %c0_54 = arith.constant 0 : index
    %c64_55 = arith.constant 64 : index
    %82 = vector.load %arg12[%c0_54, %c64_55] : memref<8x256xbf16, #tpu.memory_space<vmem>>, vector<8x64xbf16>
    tpu.vector_store %arg12[%c0_54, %c64_55], %81 {strides = array<i32>} : memref<8x256xbf16, #tpu.memory_space<vmem>>, vector<8x64xbf16>,
    %83 = vector.extract_strided_slice %78 {offsets = [16, 0], sizes = [8, 64], strides = [1, 1]} : vector<32x64xbf16> to vector<8x64xbf16>
    %c0_56 = arith.constant 0 : index
    %c128_57 = arith.constant 128 : index
    %84 = vector.load %arg12[%c0_56, %c128_57] : memref<8x256xbf16, #tpu.memory_space<vmem>>, vector<8x64xbf16>
    tpu.vector_store %arg12[%c0_56, %c128_57], %83 {strides = array<i32>} : memref<8x256xbf16, #tpu.memory_space<vmem>>, vector<8x64xbf16>,
    %85 = vector.extract_strided_slice %78 {offsets = [24, 0], sizes = [8, 64], strides = [1, 1]} : vector<32x64xbf16> to vector<8x64xbf16>
    %c0_58 = arith.constant 0 : index
    %c192_59 = arith.constant 192 : index
    %86 = vector.load %arg12[%c0_58, %c192_59] : memref<8x256xbf16, #tpu.memory_space<vmem>>, vector<8x64xbf16>
    tpu.vector_store %arg12[%c0_58, %c192_59], %85 {strides = array<i32>} : memref<8x256xbf16, #tpu.memory_space<vmem>>, vector<8x64xbf16>,
    %c0_60 = arith.constant 0 : index
    %c0_61 = arith.constant 0 : index
    %87 = vector.load %arg12[%c0_60, %c0_61] : memref<8x256xbf16, #tpu.memory_space<vmem>>, vector<8x256xbf16>
    %c0_62 = arith.constant 0 : index
    %c0_63 = arith.constant 0 : index
    %88 = vector.load %arg6[%c0_62, %c0_63] : memref<256x128xbf16, #tpu.memory_space<vmem>>, vector<256x128xbf16>
    %cst_64 = arith.constant dense<0.000000e+00> : vector<8x128xf32>
    %89 = tpu.matmul %87, %88, %cst_64 {dimension_numbers = #tpu.dot_dimension_numbers<[1], [0], [0], [1], [0, 0, 1, 1], [], []>} : vector<8x256xbf16>, vector<256x128xbf16>, vector<8x128xf32> -> vector<8x128xf32>
    %c0_65 = arith.constant 0 : index
    %c0_66 = arith.constant 0 : index
    %90 = vector.load %arg7[%c0_65, %c0_66] : memref<1x128xf32, #tpu.memory_space<vmem>>, vector<1x128xf32>
    %91 = vector.broadcast %90 : vector<1x128xf32> to vector<8x128xf32>
    %92 = arith.addf %89, %91 : vector<8x128xf32>
    %cst_67 = arith.constant 0.000000e+00 : f32
    %93 = vector.broadcast %cst_67 : f32 to vector<8x128xf32>
    %94 = arith.maximumf %92, %93 : vector<8x128xf32>
    %95 = arith.truncf %94 : vector<8x128xf32> to vector<8x128xbf16>
    %c0_68 = arith.constant 0 : index
    %c0_69 = arith.constant 0 : index
    %96 = vector.load %arg8[%c0_68, %c0_69] : memref<128x128xbf16, #tpu.memory_space<vmem>>, vector<128x128xbf16>
    %cst_70 = arith.constant dense<0.000000e+00> : vector<8x128xf32>
    %97 = tpu.matmul %95, %96, %cst_70 {dimension_numbers = #tpu.dot_dimension_numbers<[1], [0], [0], [1], [0, 0, 1, 1], [], []>} : vector<8x128xbf16>, vector<128x128xbf16>, vector<8x128xf32> -> vector<8x128xf32>
    %c0_71 = arith.constant 0 : index
    %c0_72 = arith.constant 0 : index
    %98 = vector.load %arg9[%c0_71, %c0_72] : memref<1x128xf32, #tpu.memory_space<vmem>>, vector<1x128xf32>
    %99 = vector.broadcast %98 : vector<1x128xf32> to vector<8x128xf32>
    %100 = arith.addf %97, %99 : vector<8x128xf32>
    %c0_73 = arith.constant 0 : index
    %c0_74 = arith.constant 0 : index
    %101 = vector.load %arg10[%c0_73, %c0_74] : memref<8x128xf32, #tpu.memory_space<vmem>>, vector<8x128xf32>
    tpu.vector_store %arg10[%c0_73, %c0_74], %100 {strides = array<i32>} : memref<8x128xf32, #tpu.memory_space<vmem>>, vector<8x128xf32>,
    return
  }
}

</mosaic_0001>

<llo_original>
// kernel: proj2cnn_forward.1
$region0: #{proj2cnn_forward.1}
  #allocation0 [shape = 'u32[]', space=smem, size = 0x4, offset = 0x4, fixed_abs, tag = 'smem constant byte address 0x4 - core index']
  #allocation1 [shape = 'u32[144,128]{1,0:T(1,128)}', space=vmem, size = 0x12000, scoped, tag = 'internal scratch']
  #allocation2 [shape = 'bf16[128,288]{1,0:T(16,128)(2,1)}', space=vmem, size = 0x18000, scoped, tag = 'scratch operand']
  #allocation3 [shape = 'bf16[8,256]{1,0:T(8,128)(2,1)}', space=vmem, size = 0x1000, scoped, tag = 'scratch operand']
  %s0 = inlined_call_operand.vmem [shape: bf16[128,32], index: 0, kind: input, shape index: {}]
  %s1 = inlined_call_operand.vmem [shape: bf16[32,128], index: 1, kind: input, shape index: {}]
  %s2 = inlined_call_operand.vmem [shape: f32[1,128], index: 2, kind: input, shape index: {}]
  %s3 = inlined_call_operand.vmem [shape: bf16[9,128,32], index: 3, kind: input, shape index: {}]
  %s4 = inlined_call_operand.vmem [shape: bf16[288,128], index: 4, kind: input, shape index: {}]
  %s5 = inlined_call_operand.vmem [shape: f32[1,128], index: 5, kind: input, shape index: {}]
  %s6 = inlined_call_operand.vmem [shape: bf16[256,128], index: 6, kind: input, shape index: {}]
  %s7 = inlined_call_operand.vmem [shape: f32[1,128], index: 7, kind: input, shape index: {}]
  %s8 = inlined_call_operand.vmem [shape: bf16[128,128], index: 8, kind: input, shape index: {}]
  %s9 = inlined_call_operand.vmem [shape: f32[1,128], index: 9, kind: input, shape index: {}]
  %s10 = inlined_call_operand.vmem [shape: f32[8,128], index: 10, kind: output, shape index: {}]
  %s11 = sld [smem:[#allocation0]]
  $region50: #{proj2cnn_forward.1} parent=0
    _
  %s13 = ssub.s32 1, %s11
  %s14 = scalar_select 0, %s13, %s11
  // Predicated region
  $region2: #{proj2cnn_forward.1} parent=0 // pred_check
    _
  $region3: #{proj2cnn_forward.1} parent=0 // pred_check_branch
    %16 = sbr.rel (0) target = $region5
  $region4: #{proj2cnn_forward.1} parent=0 // pred_region
    _
  $region5: #{proj2cnn_forward.1} parent=0 // pred_fallthru
    _
  // Predicated region
  $region6: #{proj2cnn_forward.1} parent=0 // pred_check
    _
  $region7: #{proj2cnn_forward.1} parent=0 // pred_check_branch
    %18 = sbr.rel (0) target = $region9
  $region8: #{proj2cnn_forward.1} parent=0 // pred_region
    _
  $region9: #{proj2cnn_forward.1} parent=0 // pred_fallthru
    _
  // Predicated region
  $region10: #{proj2cnn_forward.1} parent=0 // pred_check
    _
  $region11: #{proj2cnn_forward.1} parent=0 // pred_check_branch
    %20 = sbr.rel (0) target = $region13
  $region12: #{proj2cnn_forward.1} parent=0 // pred_region
    _
  $region13: #{proj2cnn_forward.1} parent=0 // pred_fallthru
    _
  // Predicated region
  $region14: #{proj2cnn_forward.1} parent=0 // pred_check
    _
  $region15: #{proj2cnn_forward.1} parent=0 // pred_check_branch
    %22 = sbr.rel (0) target = $region17
  $region16: #{proj2cnn_forward.1} parent=0 // pred_region
    _
  $region17: #{proj2cnn_forward.1} parent=0 // pred_fallthru
    _
  // Predicated region
  $region18: #{proj2cnn_forward.1} parent=0 // pred_check
    _
  $region19: #{proj2cnn_forward.1} parent=0 // pred_check_branch
    %24 = sbr.rel (0) target = $region21
  $region20: #{proj2cnn_forward.1} parent=0 // pred_region
    _
  $region21: #{proj2cnn_forward.1} parent=0 // pred_fallthru
    _
  // Predicated region
  $region22: #{proj2cnn_forward.1} parent=0 // pred_check
    _
  $region23: #{proj2cnn_forward.1} parent=0 // pred_check_branch
    %26 = sbr.rel (0) target = $region25
  $region24: #{proj2cnn_forward.1} parent=0 // pred_region
    _
  $region25: #{proj2cnn_forward.1} parent=0 // pred_fallthru
    _
  // Predicated region
  $region26: #{proj2cnn_forward.1} parent=0 // pred_check
    _
  $region27: #{proj2cnn_forward.1} parent=0 // pred_check_branch
    %28 = sbr.rel (0) target = $region29
  $region28: #{proj2cnn_forward.1} parent=0 // pred_region
    _
  $region29: #{proj2cnn_forward.1} parent=0 // pred_fallthru
    _
  // Predicated region
  $region30: #{proj2cnn_forward.1} parent=0 // pred_check
    _
  $region31: #{proj2cnn_forward.1} parent=0 // pred_check_branch
    %30 = sbr.rel (0) target = $region33
  $region32: #{proj2cnn_forward.1} parent=0 // pred_region
    _
  $region33: #{proj2cnn_forward.1} parent=0 // pred_fallthru
    _
  // Predicated region
  $region34: #{proj2cnn_forward.1} parent=0 // pred_check
    _
  $region35: #{proj2cnn_forward.1} parent=0 // pred_check_branch
    %32 = sbr.rel (0) target = $region37
  $region36: #{proj2cnn_forward.1} parent=0 // pred_region
    _
  $region37: #{proj2cnn_forward.1} parent=0 // pred_fallthru
    _
  // Predicated region
  $region38: #{proj2cnn_forward.1} parent=0 // pred_check
    _
  $region39: #{proj2cnn_forward.1} parent=0 // pred_check_branch
    %34 = sbr.rel (0) target = $region41
  $region40: #{proj2cnn_forward.1} parent=0 // pred_region
    _
  $region41: #{proj2cnn_forward.1} parent=0 // pred_fallthru
    _
  %v36 = vld [vmem:[%s0] sm:$0xf]
  %v37 = vld [vmem:[%s0 + $0x4] sm:$0xf]
  %v38 = vld [vmem:[%s0 + $0x8] sm:$0xf]
  %v39 = vld [vmem:[%s0 + $0xc] sm:$0xf]
  %v40 = vld [vmem:[%s0 + $0x10] sm:$0xf]
  %v41 = vld [vmem:[%s0 + $0x14] sm:$0xf]
  %v42 = vld [vmem:[%s0 + $0x18] sm:$0xf]
  %v43 = vld [vmem:[%s0 + $0x1c] sm:$0xf]
  %v44 = vld [vmem:[%s0 + $0x20] sm:$0xf]
  %v45 = vld [vmem:[%s0 + $0x24] sm:$0xf]
  %v46 = vld [vmem:[%s0 + $0x28] sm:$0xf]
  %v47 = vld [vmem:[%s0 + $0x2c] sm:$0xf]
  %v48 = vld [vmem:[%s0 + $0x30] sm:$0xf]
  %v49 = vld [vmem:[%s0 + $0x34] sm:$0xf]
  %v50 = vld [vmem:[%s0 + $0x38] sm:$0xf]
  %v51 = vld [vmem:[%s0 + $0x3c] sm:$0xf]
  %v52 = vld [vmem:[%s1] sm:$0xf]
  %v53 = vld [vmem:[%s1 + $0x4] sm:$0xf]
  %v54 = vld [vmem:[%s1 + $0x8] sm:$0xf]
  %v55 = vld [vmem:[%s1 + $0xc] sm:$0xf]
  %v72 = vunpack.c.l.b16 %v36
  %v73 = vunpack.c.l.b16 %v37
  %v74 = vunpack.c.l.b16 %v38
  %v75 = vunpack.c.l.b16 %v39
  %v76 = vunpack.c.l.b16 %v40
  %v77 = vunpack.c.l.b16 %v41
  %v78 = vunpack.c.l.b16 %v42
  %v79 = vunpack.c.l.b16 %v43
  %v80 = vunpack.c.l.b16 %v44
  %v81 = vunpack.c.l.b16 %v45
  %v82 = vunpack.c.l.b16 %v46
  %v83 = vunpack.c.l.b16 %v47
  %v84 = vunpack.c.l.b16 %v48
  %v85 = vunpack.c.l.b16 %v49
  %v86 = vunpack.c.l.b16 %v50
  %v87 = vunpack.c.l.b16 %v51
  %v88 = vpack.c.b16 %v73, %v72
  %v89 = vpack.c.b16 %v75, %v74
  %v90 = vpack.c.b16 %v77, %v76
  %v91 = vpack.c.b16 %v79, %v78
  %v92 = vpack.c.b16 %v81, %v80
  %v93 = vpack.c.b16 %v83, %v82
  %v94 = vpack.c.b16 %v85, %v84
  %v95 = vpack.c.b16 %v87, %v86
  %v100 = vunpack.c.l.b16 %v52
  %v101 = vunpack.c.l.b16 %v53
  %v102 = vunpack.c.l.b16 %v54
  %v103 = vunpack.c.l.b16 %v55
  %v104 = vpack.c.b16 %v101, %v100
  %v105 = vpack.c.b16 %v103, %v102
  %vm108 = vcmask 261120
  %v110 = vsel %vm108, %v88, 0
  %v113 = vsel %vm108, %v89, 0
  %v116 = vsel %vm108, %v90, 0
  %v119 = vsel %vm108, %v91, 0
  %v122 = vsel %vm108, %v92, 0
  %v125 = vsel %vm108, %v93, 0
  %v128 = vsel %vm108, %v94, 0
  %v131 = vsel %vm108, %v95, 0
  %133 = vmatprep.subr.bf16.mxu0 0
  %134 = vmatpush1.bf16.msra.mxu0 %v104
  %135 = vmatprep.subr.bf16.mxu0 0
  %136 = vmatpush1.bf16.msra.mxu0 %v105
  %137 = vmatprep.subr.bf16.mxu0 0
  %138 = vmatpush1.bf16.msra.mxu0 0
  %139 = vmatprep.subr.bf16.mxu0 0
  %140 = vmatpush1.bf16.msra.mxu0 0
  %141 = vmatprep.subr.bf16.mxu0 0
  %142 = vmatpush1.bf16.msra.mxu0 0
  %143 = vmatprep.subr.bf16.mxu0 0
  %144 = vmatpush1.bf16.msra.mxu0 0
  %145 = vmatprep.subr.bf16.mxu0 0
  %146 = vmatpush1.bf16.msra.mxu0 0
  %147 = vmatprep.subr.bf16.mxu0 0
  %148 = vmatpush1.bf16.msra.mxu0 0
  %149 = vmatprep.subr.bf16.mxu0 0
  %150 = vmatpush1.bf16.msra.mxu0 0
  %151 = vmatprep.subr.bf16.mxu0 0
  %152 = vmatpush1.bf16.msra.mxu0 0
  %153 = vmatprep.subr.bf16.mxu0 0
  %154 = vmatpush1.bf16.msra.mxu0 0
  %155 = vmatprep.subr.bf16.mxu0 0
  %156 = vmatpush1.bf16.msra.mxu0 0
  %157 = vmatprep.subr.bf16.mxu0 0
  %158 = vmatpush1.bf16.msra.mxu0 0
  %159 = vmatprep.subr.bf16.mxu0 0
  %160 = vmatpush1.bf16.msra.mxu0 0
  %161 = vmatprep.subr.bf16.mxu0 0
  %162 = vmatpush1.bf16.msra.mxu0 0
  %163 = vmatprep.subr.bf16.mxu0 0
  %164 = vmatpush1.bf16.msra.mxu0 0
  %165 = vmatprep.mubr.bf16.mxu0 0
  %166 = vmatmul.mubr.bf16.gmra.mrb[0].mxu0 %v110
  %v167 = vpop.f32.mrb[0].mxu0
  %v168 = vadd.f32 0.0, %v167
  %v169 = vpop.f32.mrb[0].mxu0
  %v170 = vpop.f32.mrb[0].mxu0
  %v171 = vadd.f32 0.0, %v170
  %v172 = vpop.f32.mrb[0].mxu0
  %173 = vmatprep.mubr.bf16.mxu0 0
  %174 = vmatmul.mubr.bf16.gmra.mrb[0].mxu0 %v113
  %v175 = vpop.f32.mrb[0].mxu0
  %v176 = vadd.f32 0.0, %v175
  %v177 = vpop.f32.mrb[0].mxu0
  %v178 = vpop.f32.mrb[0].mxu0
  %v179 = vadd.f32 0.0, %v178
  %v180 = vpop.f32.mrb[0].mxu0
  %181 = vmatprep.mubr.bf16.mxu0 0
  %182 = vmatmul.mubr.bf16.gmra.mrb[0].mxu0 %v116
  %v183 = vpop.f32.mrb[0].mxu0
  %v184 = vadd.f32 0.0, %v183
  %v185 = vpop.f32.mrb[0].mxu0
  %v186 = vpop.f32.mrb[0].mxu0
  %v187 = vadd.f32 0.0, %v186
  %v188 = vpop.f32.mrb[0].mxu0
  %189 = vmatprep.mubr.bf16.mxu0 0
  %190 = vmatmul.mubr.bf16.gmra.mrb[0].mxu0 %v119
  %v191 = vpop.f32.mrb[0].mxu0
  %v192 = vadd.f32 0.0, %v191
  %v193 = vpop.f32.mrb[0].mxu0
  %v194 = vpop.f32.mrb[0].mxu0
  %v195 = vadd.f32 0.0, %v194
  %v196 = vpop.f32.mrb[0].mxu0
  %197 = vmatprep.mubr.bf16.mxu0 0
  %198 = vmatmul.mubr.bf16.gmra.mrb[0].mxu0 %v122
  %v199 = vpop.f32.mrb[0].mxu0
  %v200 = vadd.f32 0.0, %v199
  %v201 = vpop.f32.mrb[0].mxu0
  %v202 = vpop.f32.mrb[0].mxu0
  %v203 = vadd.f32 0.0, %v202
  %v204 = vpop.f32.mrb[0].mxu0
  %205 = vmatprep.mubr.bf16.mxu0 0
  %206 = vmatmul.mubr.bf16.gmra.mrb[0].mxu0 %v125
  %v207 = vpop.f32.mrb[0].mxu0
  %v208 = vadd.f32 0.0, %v207
  %v209 = vpop.f32.mrb[0].mxu0
  %v210 = vpop.f32.mrb[0].mxu0
  %v211 = vadd.f32 0.0, %v210
  %v212 = vpop.f32.mrb[0].mxu0
  %213 = vmatprep.mubr.bf16.mxu0 0
  %214 = vmatmul.mubr.bf16.gmra.mrb[0].mxu0 %v128
  %v215 = vpop.f32.mrb[0].mxu0
  %v216 = vadd.f32 0.0, %v215
  %v217 = vpop.f32.mrb[0].mxu0
  %v218 = vpop.f32.mrb[0].mxu0
  %v219 = vadd.f32 0.0, %v218
  %v220 = vpop.f32.mrb[0].mxu0
  %221 = vmatprep.mubr.bf16.mxu0 0
  %222 = vmatmul.mubr.bf16.gmra.mrb[0].mxu0 %v131
  %v223 = vpop.f32.mrb[0].mxu0
  %v224 = vadd.f32 0.0, %v223
  %v225 = vpop.f32.mrb[0].mxu0
  %v226 = vpop.f32.mrb[0].mxu0
  %v227 = vadd.f32 0.0, %v226
  %v228 = vpop.f32.mrb[0].mxu0
  %229 = vdwg.mxu0
  %v230 = vmax.f32 %v168, %v184
  %v231 = vmax.f32 %v171, %v187
  %v232 = vmax.f32 %v176, %v192
  %v233 = vmax.f32 %v179, %v195
  %v234 = vmax.f32 %v200, %v216
  %v235 = vmax.f32 %v203, %v219
  %v236 = vmax.f32 %v208, %v224
  %v237 = vmax.f32 %v211, %v227
  %v238 = vmax.f32 %v230, %v234
  %v239 = vmax.f32 %v231, %v235
  %v240 = vmax.f32 %v232, %v236
  %v241 = vmax.f32 %v233, %v237
  %v242 = vld [vmem:[%s2] sm:$0x1]
  %v244 = vlaneseq
  %v245 = vshrl.u32 %v244, 7
  %v246 = vsub.s32 0, %v245
  %v247 = vrot.slane %v242, %v246
  %v249 = vadd.f32 %v238, %v247
  %v250 = vadd.f32 %v239, %v247
  %v251 = vadd.f32 %v240, %v247
  %v252 = vadd.f32 %v241, %v247
  %v253 = vmax.f32 %v249, 0.0
  %v254 = vmax.f32 %v250, 0.0
  %v255 = vmax.f32 %v251, 0.0
  %v256 = vmax.f32 %v252, 0.0
  %v257 = vpack.c.bf16 %v254, %v253
  %v258 = vpack.c.bf16 %v256, %v255
  %v259 = vld [vmem:[%s3] sm:$0xf]
  %v260 = vld [vmem:[%s3 + $0x4] sm:$0xf]
  %v261 = vld [vmem:[%s3 + $0x8] sm:$0xf]
  %v262 = vld [vmem:[%s3 + $0xc] sm:$0xf]
  %v263 = vld [vmem:[%s3 + $0x10] sm:$0xf]
  %v264 = vld [vmem:[%s3 + $0x14] sm:$0xf]
  %v265 = vld [vmem:[%s3 + $0x18] sm:$0xf]
  %v266 = vld [vmem:[%s3 + $0x1c] sm:$0xf]
  %v267 = vld [vmem:[%s3 + $0x20] sm:$0xf]
  %v268 = vld [vmem:[%s3 + $0x24] sm:$0xf]
  %v269 = vld [vmem:[%s3 + $0x28] sm:$0xf]
  %v270 = vld [vmem:[%s3 + $0x2c] sm:$0xf]
  %v271 = vld [vmem:[%s3 + $0x30] sm:$0xf]
  %v272 = vld [vmem:[%s3 + $0x34] sm:$0xf]
  %v273 = vld [vmem:[%s3 + $0x38] sm:$0xf]
  %v274 = vld [vmem:[%s3 + $0x3c] sm:$0xf]
  %v291 = vunpack.c.l.b16 %v259
  %v292 = vunpack.c.l.b16 %v260
  %v293 = vunpack.c.l.b16 %v261
  %v294 = vunpack.c.l.b16 %v262
  %v295 = vunpack.c.l.b16 %v263
  %v296 = vunpack.c.l.b16 %v264
  %v297 = vunpack.c.l.b16 %v265
  %v298 = vunpack.c.l.b16 %v266
  %v299 = vunpack.c.l.b16 %v267
  %v300 = vunpack.c.l.b16 %v268
  %v301 = vunpack.c.l.b16 %v269
  %v302 = vunpack.c.l.b16 %v270
  %v303 = vunpack.c.l.b16 %v271
  %v304 = vunpack.c.l.b16 %v272
  %v305 = vunpack.c.l.b16 %v273
  %v306 = vunpack.c.l.b16 %v274
  %v307 = vpack.c.b16 %v292, %v291
  %v308 = vpack.c.b16 %v294, %v293
  %v309 = vpack.c.b16 %v296, %v295
  %v310 = vpack.c.b16 %v298, %v297
  %v311 = vpack.c.b16 %v300, %v299
  %v312 = vpack.c.b16 %v302, %v301
  %v313 = vpack.c.b16 %v304, %v303
  %v314 = vpack.c.b16 %v306, %v305
  %v316 = vsel %vm108, %v307, 0
  %v319 = vsel %vm108, %v308, 0
  %v322 = vsel %vm108, %v309, 0
  %v325 = vsel %vm108, %v310, 0
  %v328 = vsel %vm108, %v311, 0
  %v331 = vsel %vm108, %v312, 0
  %v334 = vsel %vm108, %v313, 0
  %v337 = vsel %vm108, %v314, 0
  %339 = vmatprep.subr.bf16.mxu0 0
  %340 = vmatpush1.bf16.msra.mxu0 %v257
  %341 = vmatprep.subr.bf16.mxu0 0
  %342 = vmatpush1.bf16.msra.mxu0 %v258
  %343 = vmatprep.subr.bf16.mxu0 0
  %344 = vmatpush1.bf16.msra.mxu0 0
  %345 = vmatprep.subr.bf16.mxu0 0
  %346 = vmatpush1.bf16.msra.mxu0 0
  %347 = vmatprep.subr.bf16.mxu0 0
  %348 = vmatpush1.bf16.msra.mxu0 0
  %349 = vmatprep.subr.bf16.mxu0 0
  %350 = vmatpush1.bf16.msra.mxu0 0
  %351 = vmatprep.subr.bf16.mxu0 0
  %352 = vmatpush1.bf16.msra.mxu0 0
  %353 = vmatprep.subr.bf16.mxu0 0
  %354 = vmatpush1.bf16.msra.mxu0 0
  %355 = vmatprep.subr.bf16.mxu0 0
  %356 = vmatpush1.bf16.msra.mxu0 0
  %357 = vmatprep.subr.bf16.mxu0 0
  %358 = vmatpush1.bf16.msra.mxu0 0
  %359 = vmatprep.subr.bf16.mxu0 0
  %360 = vmatpush1.bf16.msra.mxu0 0
  %361 = vmatprep.subr.bf16.mxu0 0
  %362 = vmatpush1.bf16.msra.mxu0 0
  %363 = vmatprep.subr.bf16.mxu0 0
  %364 = vmatpush1.bf16.msra.mxu0 0
  %365 = vmatprep.subr.bf16.mxu0 0
  %366 = vmatpush1.bf16.msra.mxu0 0
  %367 = vmatprep.subr.bf16.mxu0 0
  %368 = vmatpush1.bf16.msra.mxu0 0
  %369 = vmatprep.subr.bf16.mxu0 0
  %370 = vmatpush1.bf16.msra.mxu0 0
  %371 = vmatprep.mubr.bf16.mxu0 0
  %372 = vmatmul.mubr.bf16.gmra.mrb[0].mxu0 %v316
  %v373 = vpop.f32.mrb[0].mxu0
  %v374 = vadd.f32 0.0, %v373
  %v375 = vpop.f32.mrb[0].mxu0
  %v376 = vpop.f32.mrb[0].mxu0
  %v377 = vadd.f32 0.0, %v376
  %v378 = vpop.f32.mrb[0].mxu0
  %379 = vmatprep.mubr.bf16.mxu0 0
  %380 = vmatmul.mubr.bf16.gmra.mrb[0].mxu0 %v319
  %v381 = vpop.f32.mrb[0].mxu0
  %v382 = vadd.f32 0.0, %v381
  %v383 = vpop.f32.mrb[0].mxu0
  %v384 = vpop.f32.mrb[0].mxu0
  %v385 = vadd.f32 0.0, %v384
  %v386 = vpop.f32.mrb[0].mxu0
  %387 = vmatprep.mubr.bf16.mxu0 0
  %388 = vmatmul.mubr.bf16.gmra.mrb[0].mxu0 %v322
  %v389 = vpop.f32.mrb[0].mxu0
  %v390 = vadd.f32 0.0, %v389
  %v391 = vpop.f32.mrb[0].mxu0
  %v392 = vpop.f32.mrb[0].mxu0
  %v393 = vadd.f32 0.0, %v392
  %v394 = vpop.f32.mrb[0].mxu0
  %395 = vmatprep.mubr.bf16.mxu0 0
  %396 = vmatmul.mubr.bf16.gmra.mrb[0].mxu0 %v325
  %v397 = vpop.f32.mrb[0].mxu0
  %v398 = vadd.f32 0.0, %v397
  %v399 = vpop.f32.mrb[0].mxu0
  %v400 = vpop.f32.mrb[0].mxu0
  %v401 = vadd.f32 0.0, %v400
  %v402 = vpop.f32.mrb[0].mxu0
  %403 = vmatprep.mubr.bf16.mxu0 0
  %404 = vmatmul.mubr.bf16.gmra.mrb[0].mxu0 %v328
  %v405 = vpop.f32.mrb[0].mxu0
  %v406 = vadd.f32 0.0, %v405
  %v407 = vpop.f32.mrb[0].mxu0
  %v408 = vpop.f32.mrb[0].mxu0
  %v409 = vadd.f32 0.0, %v408
  %v410 = vpop.f32.mrb[0].mxu0
  %411 = vmatprep.mubr.bf16.mxu0 0
  %412 = vmatmul.mubr.bf16.gmra.mrb[0].mxu0 %v331
  %v413 = vpop.f32.mrb[0].mxu0
  %v414 = vadd.f32 0.0, %v413
  %v415 = vpop.f32.mrb[0].mxu0
  %v416 = vpop.f32.mrb[0].mxu0
  %v417 = vadd.f32 0.0, %v416
  %v418 = vpop.f32.mrb[0].mxu0
  %419 = vmatprep.mubr.bf16.mxu0 0
  %420 = vmatmul.mubr.bf16.gmra.mrb[0].mxu0 %v334
  %v421 = vpop.f32.mrb[0].mxu0
  %v422 = vadd.f32 0.0, %v421
  %v423 = vpop.f32.mrb[0].mxu0
  %v424 = vpop.f32.mrb[0].mxu0
  %v425 = vadd.f32 0.0, %v424
  %v426 = vpop.f32.mrb[0].mxu0
  %427 = vmatprep.mubr.bf16.mxu0 0
  %428 = vmatmul.mubr.bf16.gmra.mrb[0].mxu0 %v337
  %v429 = vpop.f32.mrb[0].mxu0
  %v430 = vadd.f32 0.0, %v429
  %v431 = vpop.f32.mrb[0].mxu0
  %v432 = vpop.f32.mrb[0].mxu0
  %v433 = vadd.f32 0.0, %v432
  %v434 = vpop.f32.mrb[0].mxu0
  %435 = vdwg.mxu0
  %v436 = vpack.c.bf16 %v377, %v374
  %v437 = vpack.c.bf16 %v385, %v382
  %v438 = vpack.c.bf16 %v393, %v390
  %v439 = vpack.c.bf16 %v401, %v398
  %v440 = vpack.c.bf16 %v409, %v406
  %v441 = vpack.c.bf16 %v417, %v414
  %v442 = vpack.c.bf16 %v425, %v422
  %v443 = vpack.c.bf16 %v433, %v430
  %444 = vst.msk [vmem:[#allocation2] sm:$0xff] %vm108, %v436
  %445 = vst.msk [vmem:[#allocation2 + $0x18] sm:$0xff] %vm108, %v437
  %446 = vst.msk [vmem:[#allocation2 + $0x30] sm:$0xff] %vm108, %v438
  %447 = vst.msk [vmem:[#allocation2 + $0x48] sm:$0xff] %vm108, %v439
  %448 = vst.msk [vmem:[#allocation2 + $0x60] sm:$0xff] %vm108, %v440
  %449 = vst.msk [vmem:[#allocation2 + $0x78] sm:$0xff] %vm108, %v441
  %450 = vst.msk [vmem:[#allocation2 + $0x90] sm:$0xff] %vm108, %v442
  %451 = vst.msk [vmem:[#allocation2 + $0xa8] sm:$0xff] %vm108, %v443
  %s452 = scalar_lea.vmem %s3, 64
  %v453 = vld [vmem:[%s452] sm:$0xf]
  %v454 = vld [vmem:[%s452 + $0x4] sm:$0xf]
  %v455 = vld [vmem:[%s452 + $0x8] sm:$0xf]
  %v456 = vld [vmem:[%s452 + $0xc] sm:$0xf]
  %v457 = vld [vmem:[%s452 + $0x10] sm:$0xf]
  %v458 = vld [vmem:[%s452 + $0x14] sm:$0xf]
  %v459 = vld [vmem:[%s452 + $0x18] sm:$0xf]
  %v460 = vld [vmem:[%s452 + $0x1c] sm:$0xf]
  %v461 = vld [vmem:[%s452 + $0x20] sm:$0xf]
  %v462 = vld [vmem:[%s452 + $0x24] sm:$0xf]
  %v463 = vld [vmem:[%s452 + $0x28] sm:$0xf]
  %v464 = vld [vmem:[%s452 + $0x2c] sm:$0xf]
  %v465 = vld [vmem:[%s452 + $0x30] sm:$0xf]
  %v466 = vld [vmem:[%s452 + $0x34] sm:$0xf]
  %v467 = vld [vmem:[%s452 + $0x38] sm:$0xf]
  %v468 = vld [vmem:[%s452 + $0x3c] sm:$0xf]
  %v485 = vunpack.c.l.b16 %v453
  %v486 = vunpack.c.l.b16 %v454
  %v487 = vunpack.c.l.b16 %v455
  %v488 = vunpack.c.l.b16 %v456
  %v489 = vunpack.c.l.b16 %v457
  %v490 = vunpack.c.l.b16 %v458
  %v491 = vunpack.c.l.b16 %v459
  %v492 = vunpack.c.l.b16 %v460
  %v493 = vunpack.c.l.b16 %v461
  %v494 = vunpack.c.l.b16 %v462
  %v495 = vunpack.c.l.b16 %v463
  %v496 = vunpack.c.l.b16 %v464
  %v497 = vunpack.c.l.b16 %v465
  %v498 = vunpack.c.l.b16 %v466
  %v499 = vunpack.c.l.b16 %v467
  %v500 = vunpack.c.l.b16 %v468
  %v501 = vpack.c.b16 %v486, %v485
  %v502 = vpack.c.b16 %v488, %v487
  %v503 = vpack.c.b16 %v490, %v489
  %v504 = vpack.c.b16 %v492, %v491
  %v505 = vpack.c.b16 %v494, %v493
  %v506 = vpack.c.b16 %v496, %v495
  %v507 = vpack.c.b16 %v498, %v497
  %v508 = vpack.c.b16 %v500, %v499
  %v510 = vsel %vm108, %v501, 0
  %v513 = vsel %vm108, %v502, 0
  %v516 = vsel %vm108, %v503, 0
  %v519 = vsel %vm108, %v504, 0
  %v522 = vsel %vm108, %v505, 0
  %v525 = vsel %vm108, %v506, 0
  %v528 = vsel %vm108, %v507, 0
  %v531 = vsel %vm108, %v508, 0
  %533 = vmatprep.subr.bf16.mxu0 0
  %534 = vmatpush1.bf16.msra.mxu0 %v257
  %535 = vmatprep.subr.bf16.mxu0 0
  %536 = vmatpush1.bf16.msra.mxu0 %v258
  %537 = vmatprep.subr.bf16.mxu0 0
  %538 = vmatpush1.bf16.msra.mxu0 0
  %539 = vmatprep.subr.bf16.mxu0 0
  %540 = vmatpush1.bf16.msra.mxu0 0
  %541 = vmatprep.subr.bf16.mxu0 0
  %542 = vmatpush1.bf16.msra.mxu0 0
  %543 = vmatprep.subr.bf16.mxu0 0
  %544 = vmatpush1.bf16.msra.mxu0 0
  %545 = vmatprep.subr.bf16.mxu0 0
  %546 = vmatpush1.bf16.msra.mxu0 0
  %547 = vmatprep.subr.bf16.mxu0 0
  %548 = vmatpush1.bf16.msra.mxu0 0
  %549 = vmatprep.subr.bf16.mxu0 0
  %550 = vmatpush1.bf16.msra.mxu0 0
  %551 = vmatprep.subr.bf16.mxu0 0
  %552 = vmatpush1.bf16.msra.mxu0 0
  %553 = vmatprep.subr.bf16.mxu0 0
  %554 = vmatpush1.bf16.msra.mxu0 0
  %555 = vmatprep.subr.bf16.mxu0 0
  %556 = vmatpush1.bf16.msra.mxu0 0
  %557 = vmatprep.subr.bf16.mxu0 0
  %558 = vmatpush1.bf16.msra.mxu0 0
  %559 = vmatprep.subr.bf16.mxu0 0
  %560 = vmatpush1.bf16.msra.mxu0 0
  %561 = vmatprep.subr.bf16.mxu0 0
  %562 = vmatpush1.bf16.msra.mxu0 0
  %563 = vmatprep.subr.bf16.mxu0 0
  %564 = vmatpush1.bf16.msra.mxu0 0
  %565 = vmatprep.mubr.bf16.mxu0 0
  %566 = vmatmul.mubr.bf16.gmra.mrb[0].mxu0 %v510
  %v567 = vpop.f32.mrb[0].mxu0
  %v568 = vadd.f32 0.0, %v567
  %v569 = vpop.f32.mrb[0].mxu0
  %v570 = vpop.f32.mrb[0].mxu0
  %v571 = vadd.f32 0.0, %v570
  %v572 = vpop.f32.mrb[0].mxu0
  %573 = vmatprep.mubr.bf16.mxu0 0
  %574 = vmatmul.mubr.bf16.gmra.mrb[0].mxu0 %v513
  %v575 = vpop.f32.mrb[0].mxu0
  %v576 = vadd.f32 0.0, %v575
  %v577 = vpop.f32.mrb[0].mxu0
  %v578 = vpop.f32.mrb[0].mxu0
  %v579 = vadd.f32 0.0, %v578
  %v580 = vpop.f32.mrb[0].mxu0
  %581 = vmatprep.mubr.bf16.mxu0 0
  %582 = vmatmul.mubr.bf16.gmra.mrb[0].mxu0 %v516
  %v583 = vpop.f32.mrb[0].mxu0
  %v584 = vadd.f32 0.0, %v583
  %v585 = vpop.f32.mrb[0].mxu0
  %v586 = vpop.f32.mrb[0].mxu0
  %v587 = vadd.f32 0.0, %v586
  %v588 = vpop.f32.mrb[0].mxu0
  %589 = vmatprep.mubr.bf16.mxu0 0
  %590 = vmatmul.mubr.bf16.gmra.mrb[0].mxu0 %v519
  %v591 = vpop.f32.mrb[0].mxu0
  %v592 = vadd.f32 0.0, %v591
  %v593 = vpop.f32.mrb[0].mxu0
  %v594 = vpop.f32.mrb[0].mxu0
  %v595 = vadd.f32 0.0, %v594
  %v596 = vpop.f32.mrb[0].mxu0
  %597 = vmatprep.mubr.bf16.mxu0 0
  %598 = vmatmul.mubr.bf16.gmra.mrb[0].mxu0 %v522
  %v599 = vpop.f32.mrb[0].mxu0
  %v600 = vadd.f32 0.0, %v599
  %v601 = vpop.f32.mrb[0].mxu0
  %v602 = vpop.f32.mrb[0].mxu0
  %v603 = vadd.f32 0.0, %v602
  %v604 = vpop.f32.mrb[0].mxu0
  %605 = vmatprep.mubr.bf16.mxu0 0
  %606 = vmatmul.mubr.bf16.gmra.mrb[0].mxu0 %v525
  %v607 = vpop.f32.mrb[0].mxu0
  %v608 = vadd.f32 0.0, %v607
  %v609 = vpop.f32.mrb[0].mxu0
  %v610 = vpop.f32.mrb[0].mxu0
  %v611 = vadd.f32 0.0, %v610
  %v612 = vpop.f32.mrb[0].mxu0
  %613 = vmatprep.mubr.bf16.mxu0 0
  %614 = vmatmul.mubr.bf16.gmra.mrb[0].mxu0 %v528
  %v615 = vpop.f32.mrb[0].mxu0
  %v616 = vadd.f32 0.0, %v615
  %v617 = vpop.f32.mrb[0].mxu0
  %v618 = vpop.f32.mrb[0].mxu0
  %v619 = vadd.f32 0.0, %v618
  %v620 = vpop.f32.mrb[0].mxu0
  %621 = vmatprep.mubr.bf16.mxu0 0
  %622 = vmatmul.mubr.bf16.gmra.mrb[0].mxu0 %v531
  %v623 = vpop.f32.mrb[0].mxu0
  %v624 = vadd.f32 0.0, %v623
  %v625 = vpop.f32.mrb[0].mxu0
  %v626 = vpop.f32.mrb[0].mxu0
  %v627 = vadd.f32 0.0, %v626
  %v628 = vpop.f32.mrb[0].mxu0
  %629 = vdwg.mxu0
  %v630 = vpack.c.bf16 %v571, %v568
  %v631 = vpack.c.bf16 %v579, %v576
  %v632 = vpack.c.bf16 %v587, %v584
  %v633 = vpack.c.bf16 %v595, %v592
  %v634 = vpack.c.bf16 %v603, %v600
  %v635 = vpack.c.bf16 %v611, %v608
  %v636 = vpack.c.bf16 %v619, %v616
  %v637 = vpack.c.bf16 %v627, %v624
  %646 = vrot.lane.b32.xlu0 %v630, 32
  %v647 = vpop.permute.xlu0 %646
  %648 = vrot.lane.b32.xlu0 %v631, 32
  %v649 = vpop.permute.xlu0 %648
  %650 = vrot.lane.b32.xlu0 %v632, 32
  %v651 = vpop.permute.xlu0 %650
  %652 = vrot.lane.b32.xlu0 %v633, 32
  %v653 = vpop.permute.xlu0 %652
  %654 = vrot.lane.b32.xlu0 %v634, 32
  %v655 = vpop.permute.xlu0 %654
  %656 = vrot.lane.b32.xlu0 %v635, 32
  %v657 = vpop.permute.xlu0 %656
  %658 = vrot.lane.b32.xlu0 %v636, 32
  %v659 = vpop.permute.xlu0 %658
  %660 = vrot.lane.b32.xlu0 %v637, 32
  %v661 = vpop.permute.xlu0 %660
  %vm670 = vcmask 523520
  %671 = vst.msk [vmem:[#allocation2] sm:$0xff] %vm670, %v647
  %672 = vst.msk [vmem:[#allocation2 + $0x18] sm:$0xff] %vm670, %v649
  %673 = vst.msk [vmem:[#allocation2 + $0x30] sm:$0xff] %vm670, %v651
  %674 = vst.msk [vmem:[#allocation2 + $0x48] sm:$0xff] %vm670, %v653
  %675 = vst.msk [vmem:[#allocation2 + $0x60] sm:$0xff] %vm670, %v655
  %676 = vst.msk [vmem:[#allocation2 + $0x78] sm:$0xff] %vm670, %v657
  %677 = vst.msk [vmem:[#allocation2 + $0x90] sm:$0xff] %vm670, %v659
  %678 = vst.msk [vmem:[#allocation2 + $0xa8] sm:$0xff] %vm670, %v661
  %s679 = scalar_lea.vmem %s3, 128
  %v680 = vld [vmem:[%s679] sm:$0xf]
  %v681 = vld [vmem:[%s679 + $0x4] sm:$0xf]
  %v682 = vld [vmem:[%s679 + $0x8] sm:$0xf]
  %v683 = vld [vmem:[%s679 + $0xc] sm:$0xf]
  %v684 = vld [vmem:[%s679 + $0x10] sm:$0xf]
  %v685 = vld [vmem:[%s679 + $0x14] sm:$0xf]
  %v686 = vld [vmem:[%s679 + $0x18] sm:$0xf]
  %v687 = vld [vmem:[%s679 + $0x1c] sm:$0xf]
  %v688 = vld [vmem:[%s679 + $0x20] sm:$0xf]
  %v689 = vld [vmem:[%s679 + $0x24] sm:$0xf]
  %v690 = vld [vmem:[%s679 + $0x28] sm:$0xf]
  %v691 = vld [vmem:[%s679 + $0x2c] sm:$0xf]
  %v692 = vld [vmem:[%s679 + $0x30] sm:$0xf]
  %v693 = vld [vmem:[%s679 + $0x34] sm:$0xf]
  %v694 = vld [vmem:[%s679 + $0x38] sm:$0xf]
  %v695 = vld [vmem:[%s679 + $0x3c] sm:$0xf]
  %v712 = vunpack.c.l.b16 %v680
  %v713 = vunpack.c.l.b16 %v681
  %v714 = vunpack.c.l.b16 %v682
  %v715 = vunpack.c.l.b16 %v683
  %v716 = vunpack.c.l.b16 %v684
  %v717 = vunpack.c.l.b16 %v685
  %v718 = vunpack.c.l.b16 %v686
  %v719 = vunpack.c.l.b16 %v687
  %v720 = vunpack.c.l.b16 %v688
  %v721 = vunpack.c.l.b16 %v689
  %v722 = vunpack.c.l.b16 %v690
  %v723 = vunpack.c.l.b16 %v691
  %v724 = vunpack.c.l.b16 %v692
  %v725 = vunpack.c.l.b16 %v693
  %v726 = vunpack.c.l.b16 %v694
  %v727 = vunpack.c.l.b16 %v695
  %v728 = vpack.c.b16 %v713, %v712
  %v729 = vpack.c.b16 %v715, %v714
  %v730 = vpack.c.b16 %v717, %v716
  %v731 = vpack.c.b16 %v719, %v718
  %v732 = vpack.c.b16 %v721, %v720
  %v733 = vpack.c.b16 %v723, %v722
  %v734 = vpack.c.b16 %v725, %v724
  %v735 = vpack.c.b16 %v727, %v726
  %v737 = vsel %vm108, %v728, 0
  %v740 = vsel %vm108, %v729, 0
  %v743 = vsel %vm108, %v730, 0
  %v746 = vsel %vm108, %v731, 0
  %v749 = vsel %vm108, %v732, 0
  %v752 = vsel %vm108, %v733, 0
  %v755 = vsel %vm108, %v734, 0
  %v758 = vsel %vm108, %v735, 0
  %760 = vmatprep.subr.bf16.mxu0 0
  %761 = vmatpush1.bf16.msra.mxu0 %v257
  %762 = vmatprep.subr.bf16.mxu0 0
  %763 = vmatpush1.bf16.msra.mxu0 %v258
  %764 = vmatprep.subr.bf16.mxu0 0
  %765 = vmatpush1.bf16.msra.mxu0 0
  %766 = vmatprep.subr.bf16.mxu0 0
  %767 = vmatpush1.bf16.msra.mxu0 0
  %768 = vmatprep.subr.bf16.mxu0 0
  %769 = vmatpush1.bf16.msra.mxu0 0
  %770 = vmatprep.subr.bf16.mxu0 0
  %771 = vmatpush1.bf16.msra.mxu0 0
  %772 = vmatprep.subr.bf16.mxu0 0
  %773 = vmatpush1.bf16.msra.mxu0 0
  %774 = vmatprep.subr.bf16.mxu0 0
  %775 = vmatpush1.bf16.msra.mxu0 0
  %776 = vmatprep.subr.bf16.mxu0 0
  %777 = vmatpush1.bf16.msra.mxu0 0
  %778 = vmatprep.subr.bf16.mxu0 0
  %779 = vmatpush1.bf16.msra.mxu0 0
  %780 = vmatprep.subr.bf16.mxu0 0
  %781 = vmatpush1.bf16.msra.mxu0 0
  %782 = vmatprep.subr.bf16.mxu0 0
  %783 = vmatpush1.bf16.msra.mxu0 0
  %784 = vmatprep.subr.bf16.mxu0 0
  %785 = vmatpush1.bf16.msra.mxu0 0
  %786 = vmatprep.subr.bf16.mxu0 0
  %787 = vmatpush1.bf16.msra.mxu0 0
  %788 = vmatprep.subr.bf16.mxu0 0
  %789 = vmatpush1.bf16.msra.mxu0 0
  %790 = vmatprep.subr.bf16.mxu0 0
  %791 = vmatpush1.bf16.msra.mxu0 0
  %792 = vmatprep.mubr.bf16.mxu0 0
  %793 = vmatmul.mubr.bf16.gmra.mrb[0].mxu0 %v737
  %v794 = vpop.f32.mrb[0].mxu0
  %v795 = vadd.f32 0.0, %v794
  %v796 = vpop.f32.mrb[0].mxu0
  %v797 = vpop.f32.mrb[0].mxu0
  %v798 = vadd.f32 0.0, %v797
  %v799 = vpop.f32.mrb[0].mxu0
  %800 = vmatprep.mubr.bf16.mxu0 0
  %801 = vmatmul.mubr.bf16.gmra.mrb[0].mxu0 %v740
  %v802 = vpop.f32.mrb[0].mxu0
  %v803 = vadd.f32 0.0, %v802
  %v804 = vpop.f32.mrb[0].mxu0
  %v805 = vpop.f32.mrb[0].mxu0
  %v806 = vadd.f32 0.0, %v805
  %v807 = vpop.f32.mrb[0].mxu0
  %808 = vmatprep.mubr.bf16.mxu0 0
  %809 = vmatmul.mubr.bf16.gmra.mrb[0].mxu0 %v743
  %v810 = vpop.f32.mrb[0].mxu0
  %v811 = vadd.f32 0.0, %v810
  %v812 = vpop.f32.mrb[0].mxu0
  %v813 = vpop.f32.mrb[0].mxu0
  %v814 = vadd.f32 0.0, %v813
  %v815 = vpop.f32.mrb[0].mxu0
  %816 = vmatprep.mubr.bf16.mxu0 0
  %817 = vmatmul.mubr.bf16.gmra.mrb[0].mxu0 %v746
  %v818 = vpop.f32.mrb[0].mxu0
  %v819 = vadd.f32 0.0, %v818
  %v820 = vpop.f32.mrb[0].mxu0
  %v821 = vpop.f32.mrb[0].mxu0
  %v822 = vadd.f32 0.0, %v821
  %v823 = vpop.f32.mrb[0].mxu0
  %824 = vmatprep.mubr.bf16.mxu0 0
  %825 = vmatmul.mubr.bf16.gmra.mrb[0].mxu0 %v749
  %v826 = vpop.f32.mrb[0].mxu0
  %v827 = vadd.f32 0.0, %v826
  %v828 = vpop.f32.mrb[0].mxu0
  %v829 = vpop.f32.mrb[0].mxu0
  %v830 = vadd.f32 0.0, %v829
  %v831 = vpop.f32.mrb[0].mxu0
  %832 = vmatprep.mubr.bf16.mxu0 0
  %833 = vmatmul.mubr.bf16.gmra.mrb[0].mxu0 %v752
  %v834 = vpop.f32.mrb[0].mxu0
  %v835 = vadd.f32 0.0, %v834
  %v836 = vpop.f32.mrb[0].mxu0
  %v837 = vpop.f32.mrb[0].mxu0
  %v838 = vadd.f32 0.0, %v837
  %v839 = vpop.f32.mrb[0].mxu0
  %840 = vmatprep.mubr.bf16.mxu0 0
  %841 = vmatmul.mubr.bf16.gmra.mrb[0].mxu0 %v755
  %v842 = vpop.f32.mrb[0].mxu0
  %v843 = vadd.f32 0.0, %v842
  %v844 = vpop.f32.mrb[0].mxu0
  %v845 = vpop.f32.mrb[0].mxu0
  %v846 = vadd.f32 0.0, %v845
  %v847 = vpop.f32.mrb[0].mxu0
  %848 = vmatprep.mubr.bf16.mxu0 0
  %849 = vmatmul.mubr.bf16.gmra.mrb[0].mxu0 %v758
  %v850 = vpop.f32.mrb[0].mxu0
  %v851 = vadd.f32 0.0, %v850
  %v852 = vpop.f32.mrb[0].mxu0
  %v853 = vpop.f32.mrb[0].mxu0
  %v854 = vadd.f32 0.0, %v853
  %v855 = vpop.f32.mrb[0].mxu0
  %856 = vdwg.mxu0
  %v857 = vpack.c.bf16 %v798, %v795
  %v858 = vpack.c.bf16 %v806, %v803
  %v859 = vpack.c.bf16 %v814, %v811
  %v860 = vpack.c.bf16 %v822, %v819
  %v861 = vpack.c.bf16 %v830, %v827
  %v862 = vpack.c.bf16 %v838, %v835
  %v863 = vpack.c.bf16 %v846, %v843
  %v864 = vpack.c.bf16 %v854, %v851
  %873 = vrot.lane.b32.xlu0 %v857, 64
  %v874 = vpop.permute.xlu0 %873
  %875 = vrot.lane.b32.xlu0 %v858, 64
  %v876 = vpop.permute.xlu0 %875
  %877 = vrot.lane.b32.xlu0 %v859, 64
  %v878 = vpop.permute.xlu0 %877
  %879 = vrot.lane.b32.xlu0 %v860, 64
  %v880 = vpop.permute.xlu0 %879
  %881 = vrot.lane.b32.xlu0 %v861, 64
  %v882 = vpop.permute.xlu0 %881
  %883 = vrot.lane.b32.xlu0 %v862, 64
  %v884 = vpop.permute.xlu0 %883
  %885 = vrot.lane.b32.xlu0 %v863, 64
  %v886 = vpop.permute.xlu0 %885
  %887 = vrot.lane.b32.xlu0 %v864, 64
  %v888 = vpop.permute.xlu0 %887
  %vm897 = vcmask 785920
  %898 = vst.msk [vmem:[#allocation2] sm:$0xff] %vm897, %v874
  %899 = vst.msk [vmem:[#allocation2 + $0x18] sm:$0xff] %vm897, %v876
  %900 = vst.msk [vmem:[#allocation2 + $0x30] sm:$0xff] %vm897, %v878
  %901 = vst.msk [vmem:[#allocation2 + $0x48] sm:$0xff] %vm897, %v880
  %902 = vst.msk [vmem:[#allocation2 + $0x60] sm:$0xff] %vm897, %v882
  %903 = vst.msk [vmem:[#allocation2 + $0x78] sm:$0xff] %vm897, %v884
  %904 = vst.msk [vmem:[#allocation2 + $0x90] sm:$0xff] %vm897, %v886
  %905 = vst.msk [vmem:[#allocation2 + $0xa8] sm:$0xff] %vm897, %v888
  %s906 = scalar_lea.vmem %s3, 192
  %v907 = vld [vmem:[%s906] sm:$0xf]
  %v908 = vld [vmem:[%s906 + $0x4] sm:$0xf]
  %v909 = vld [vmem:[%s906 + $0x8] sm:$0xf]
  %v910 = vld [vmem:[%s906 + $0xc] sm:$0xf]
  %v911 = vld [vmem:[%s906 + $0x10] sm:$0xf]
  %v912 = vld [vmem:[%s906 + $0x14] sm:$0xf]
  %v913 = vld [vmem:[%s906 + $0x18] sm:$0xf]
  %v914 = vld [vmem:[%s906 + $0x1c] sm:$0xf]
  %v915 = vld [vmem:[%s906 + $0x20] sm:$0xf]
  %v916 = vld [vmem:[%s906 + $0x24] sm:$0xf]
  %v917 = vld [vmem:[%s906 + $0x28] sm:$0xf]
  %v918 = vld [vmem:[%s906 + $0x2c] sm:$0xf]
  %v919 = vld [vmem:[%s906 + $0x30] sm:$0xf]
  %v920 = vld [vmem:[%s906 + $0x34] sm:$0xf]
  %v921 = vld [vmem:[%s906 + $0x38] sm:$0xf]
  %v922 = vld [vmem:[%s906 + $0x3c] sm:$0xf]
  %v939 = vunpack.c.l.b16 %v907
  %v940 = vunpack.c.l.b16 %v908
  %v941 = vunpack.c.l.b16 %v909
  %v942 = vunpack.c.l.b16 %v910
  %v943 = vunpack.c.l.b16 %v911
  %v944 = vunpack.c.l.b16 %v912
  %v945 = vunpack.c.l.b16 %v913
  %v946 = vunpack.c.l.b16 %v914
  %v947 = vunpack.c.l.b16 %v915
  %v948 = vunpack.c.l.b16 %v916
  %v949 = vunpack.c.l.b16 %v917
  %v950 = vunpack.c.l.b16 %v918
  %v951 = vunpack.c.l.b16 %v919
  %v952 = vunpack.c.l.b16 %v920
  %v953 = vunpack.c.l.b16 %v921
  %v954 = vunpack.c.l.b16 %v922
  %v955 = vpack.c.b16 %v940, %v939
  %v956 = vpack.c.b16 %v942, %v941
  %v957 = vpack.c.b16 %v944, %v943
  %v958 = vpack.c.b16 %v946, %v945
  %v959 = vpack.c.b16 %v948, %v947
  %v960 = vpack.c.b16 %v950, %v949
  %v961 = vpack.c.b16 %v952, %v951
  %v962 = vpack.c.b16 %v954, %v953
  %v964 = vsel %vm108, %v955, 0
  %v967 = vsel %vm108, %v956, 0
  %v970 = vsel %vm108, %v957, 0
  %v973 = vsel %vm108, %v958, 0
  %v976 = vsel %vm108, %v959, 0
  %v979 = vsel %vm108, %v960, 0
  %v982 = vsel %vm108, %v961, 0
  %v985 = vsel %vm108, %v962, 0
  %987 = vmatprep.subr.bf16.mxu0 0
  %988 = vmatpush1.bf16.msra.mxu0 %v257
  %989 = vmatprep.subr.bf16.mxu0 0
  %990 = vmatpush1.bf16.msra.mxu0 %v258
  %991 = vmatprep.subr.bf16.mxu0 0
  %992 = vmatpush1.bf16.msra.mxu0 0
  %993 = vmatprep.subr.bf16.mxu0 0
  %994 = vmatpush1.bf16.msra.mxu0 0
  %995 = vmatprep.subr.bf16.mxu0 0
  %996 = vmatpush1.bf16.msra.mxu0 0
  %997 = vmatprep.subr.bf16.mxu0 0
  %998 = vmatpush1.bf16.msra.mxu0 0
  %999 = vmatprep.subr.bf16.mxu0 0
  %1000 = vmatpush1.bf16.msra.mxu0 0
  %1001 = vmatprep.subr.bf16.mxu0 0
  %1002 = vmatpush1.bf16.msra.mxu0 0
  %1003 = vmatprep.subr.bf16.mxu0 0
  %1004 = vmatpush1.bf16.msra.mxu0 0
  %1005 = vmatprep.subr.bf16.mxu0 0
  %1006 = vmatpush1.bf16.msra.mxu0 0
  %1007 = vmatprep.subr.bf16.mxu0 0
  %1008 = vmatpush1.bf16.msra.mxu0 0
  %1009 = vmatprep.subr.bf16.mxu0 0
  %1010 = vmatpush1.bf16.msra.mxu0 0
  %1011 = vmatprep.subr.bf16.mxu0 0
  %1012 = vmatpush1.bf16.msra.mxu0 0
  %1013 = vmatprep.subr.bf16.mxu0 0
  %1014 = vmatpush1.bf16.msra.mxu0 0
  %1015 = vmatprep.subr.bf16.mxu0 0
  %1016 = vmatpush1.bf16.msra.mxu0 0
  %1017 = vmatprep.subr.bf16.mxu0 0
  %1018 = vmatpush1.bf16.msra.mxu0 0
  %1019 = vmatprep.mubr.bf16.mxu0 0
  %1020 = vmatmul.mubr.bf16.gmra.mrb[0].mxu0 %v964
  %v1021 = vpop.f32.mrb[0].mxu0
  %v1022 = vadd.f32 0.0, %v1021
  %v1023 = vpop.f32.mrb[0].mxu0
  %v1024 = vpop.f32.mrb[0].mxu0
  %v1025 = vadd.f32 0.0, %v1024
  %v1026 = vpop.f32.mrb[0].mxu0
  %1027 = vmatprep.mubr.bf16.mxu0 0
  %1028 = vmatmul.mubr.bf16.gmra.mrb[0].mxu0 %v967
  %v1029 = vpop.f32.mrb[0].mxu0
  %v1030 = vadd.f32 0.0, %v1029
  %v1031 = vpop.f32.mrb[0].mxu0
  %v1032 = vpop.f32.mrb[0].mxu0
  %v1033 = vadd.f32 0.0, %v1032
  %v1034 = vpop.f32.mrb[0].mxu0
  %1035 = vmatprep.mubr.bf16.mxu0 0
  %1036 = vmatmul.mubr.bf16.gmra.mrb[0].mxu0 %v970
  %v1037 = vpop.f32.mrb[0].mxu0
  %v1038 = vadd.f32 0.0, %v1037
  %v1039 = vpop.f32.mrb[0].mxu0
  %v1040 = vpop.f32.mrb[0].mxu0
  %v1041 = vadd.f32 0.0, %v1040
  %v1042 = vpop.f32.mrb[0].mxu0
  %1043 = vmatprep.mubr.bf16.mxu0 0
  %1044 = vmatmul.mubr.bf16.gmra.mrb[0].mxu0 %v973
  %v1045 = vpop.f32.mrb[0].mxu0
  %v1046 = vadd.f32 0.0, %v1045
  %v1047 = vpop.f32.mrb[0].mxu0
  %v1048 = vpop.f32.mrb[0].mxu0
  %v1049 = vadd.f32 0.0, %v1048
  %v1050 = vpop.f32.mrb[0].mxu0
  %1051 = vmatprep.mubr.bf16.mxu0 0
  %1052 = vmatmul.mubr.bf16.gmra.mrb[0].mxu0 %v976
  %v1053 = vpop.f32.mrb[0].mxu0
  %v1054 = vadd.f32 0.0, %v1053
  %v1055 = vpop.f32.mrb[0].mxu0
  %v1056 = vpop.f32.mrb[0].mxu0
  %v1057 = vadd.f32 0.0, %v1056
  %v1058 = vpop.f32.mrb[0].mxu0
  %1059 = vmatprep.mubr.bf16.mxu0 0
  %1060 = vmatmul.mubr.bf16.gmra.mrb[0].mxu0 %v979
  %v1061 = vpop.f32.mrb[0].mxu0
  %v1062 = vadd.f32 0.0, %v1061
  %v1063 = vpop.f32.mrb[0].mxu0
  %v1064 = vpop.f32.mrb[0].mxu0
  %v1065 = vadd.f32 0.0, %v1064
  %v1066 = vpop.f32.mrb[0].mxu0
  %1067 = vmatprep.mubr.bf16.mxu0 0
  %1068 = vmatmul.mubr.bf16.gmra.mrb[0].mxu0 %v982
  %v1069 = vpop.f32.mrb[0].mxu0
  %v1070 = vadd.f32 0.0, %v1069
  %v1071 = vpop.f32.mrb[0].mxu0
  %v1072 = vpop.f32.mrb[0].mxu0
  %v1073 = vadd.f32 0.0, %v1072
  %v1074 = vpop.f32.mrb[0].mxu0
  %1075 = vmatprep.mubr.bf16.mxu0 0
  %1076 = vmatmul.mubr.bf16.gmra.mrb[0].mxu0 %v985
  %v1077 = vpop.f32.mrb[0].mxu0
  %v1078 = vadd.f32 0.0, %v1077
  %v1079 = vpop.f32.mrb[0].mxu0
  %v1080 = vpop.f32.mrb[0].mxu0
  %v1081 = vadd.f32 0.0, %v1080
  %v1082 = vpop.f32.mrb[0].mxu0
  %1083 = vdwg.mxu0
  %v1084 = vpack.c.bf16 %v1025, %v1022
  %v1085 = vpack.c.bf16 %v1033, %v1030
  %v1086 = vpack.c.bf16 %v1041, %v1038
  %v1087 = vpack.c.bf16 %v1049, %v1046
  %v1088 = vpack.c.bf16 %v1057, %v1054
  %v1089 = vpack.c.bf16 %v1065, %v1062
  %v1090 = vpack.c.bf16 %v1073, %v1070
  %v1091 = vpack.c.bf16 %v1081, %v1078
  %1100 = vrot.lane.b32.xlu0 %v1084, 96
  %v1101 = vpop.permute.xlu0 %1100
  %1102 = vrot.lane.b32.xlu0 %v1085, 96
  %v1103 = vpop.permute.xlu0 %1102
  %1104 = vrot.lane.b32.xlu0 %v1086, 96
  %v1105 = vpop.permute.xlu0 %1104
  %1106 = vrot.lane.b32.xlu0 %v1087, 96
  %v1107 = vpop.permute.xlu0 %1106
  %1108 = vrot.lane.b32.xlu0 %v1088, 96
  %v1109 = vpop.permute.xlu0 %1108
  %1110 = vrot.lane.b32.xlu0 %v1089, 96
  %v1111 = vpop.permute.xlu0 %1110
  %1112 = vrot.lane.b32.xlu0 %v1090, 96
  %v1113 = vpop.permute.xlu0 %1112
  %1114 = vrot.lane.b32.xlu0 %v1091, 96
  %v1115 = vpop.permute.xlu0 %1114
  %vm1124 = vcmask 1048320
  %1125 = vst.msk [vmem:[#allocation2] sm:$0xff] %vm1124, %v1101
  %1126 = vst.msk [vmem:[#allocation2 + $0x18] sm:$0xff] %vm1124, %v1103
  %1127 = vst.msk [vmem:[#allocation2 + $0x30] sm:$0xff] %vm1124, %v1105
  %1128 = vst.msk [vmem:[#allocation2 + $0x48] sm:$0xff] %vm1124, %v1107
  %1129 = vst.msk [vmem:[#allocation2 + $0x60] sm:$0xff] %vm1124, %v1109
  %1130 = vst.msk [vmem:[#allocation2 + $0x78] sm:$0xff] %vm1124, %v1111
  %1131 = vst.msk [vmem:[#allocation2 + $0x90] sm:$0xff] %vm1124, %v1113
  %1132 = vst.msk [vmem:[#allocation2 + $0xa8] sm:$0xff] %vm1124, %v1115
  %s1133 = scalar_lea.vmem %s3, 256
  %v1134 = vld [vmem:[%s1133] sm:$0xf]
  %v1135 = vld [vmem:[%s1133 + $0x4] sm:$0xf]
  %v1136 = vld [vmem:[%s1133 + $0x8] sm:$0xf]
  %v1137 = vld [vmem:[%s1133 + $0xc] sm:$0xf]
  %v1138 = vld [vmem:[%s1133 + $0x10] sm:$0xf]
  %v1139 = vld [vmem:[%s1133 + $0x14] sm:$0xf]
  %v1140 = vld [vmem:[%s1133 + $0x18] sm:$0xf]
  %v1141 = vld [vmem:[%s1133 + $0x1c] sm:$0xf]
  %v1142 = vld [vmem:[%s1133 + $0x20] sm:$0xf]
  %v1143 = vld [vmem:[%s1133 + $0x24] sm:$0xf]
  %v1144 = vld [vmem:[%s1133 + $0x28] sm:$0xf]
  %v1145 = vld [vmem:[%s1133 + $0x2c] sm:$0xf]
  %v1146 = vld [vmem:[%s1133 + $0x30] sm:$0xf]
  %v1147 = vld [vmem:[%s1133 + $0x34] sm:$0xf]
  %v1148 = vld [vmem:[%s1133 + $0x38] sm:$0xf]
  %v1149 = vld [vmem:[%s1133 + $0x3c] sm:$0xf]
  %v1166 = vunpack.c.l.b16 %v1134
  %v1167 = vunpack.c.l.b16 %v1135
  %v1168 = vunpack.c.l.b16 %v1136
  %v1169 = vunpack.c.l.b16 %v1137
  %v1170 = vunpack.c.l.b16 %v1138
  %v1171 = vunpack.c.l.b16 %v1139
  %v1172 = vunpack.c.l.b16 %v1140
  %v1173 = vunpack.c.l.b16 %v1141
  %v1174 = vunpack.c.l.b16 %v1142
  %v1175 = vunpack.c.l.b16 %v1143
  %v1176 = vunpack.c.l.b16 %v1144
  %v1177 = vunpack.c.l.b16 %v1145
  %v1178 = vunpack.c.l.b16 %v1146
  %v1179 = vunpack.c.l.b16 %v1147
  %v1180 = vunpack.c.l.b16 %v1148
  %v1181 = vunpack.c.l.b16 %v1149
  %v1182 = vpack.c.b16 %v1167, %v1166
  %v1183 = vpack.c.b16 %v1169, %v1168
  %v1184 = vpack.c.b16 %v1171, %v1170
  %v1185 = vpack.c.b16 %v1173, %v1172
  %v1186 = vpack.c.b16 %v1175, %v1174
  %v1187 = vpack.c.b16 %v1177, %v1176
  %v1188 = vpack.c.b16 %v1179, %v1178
  %v1189 = vpack.c.b16 %v1181, %v1180
  %v1191 = vsel %vm108, %v1182, 0
  %v1194 = vsel %vm108, %v1183, 0
  %v1197 = vsel %vm108, %v1184, 0
  %v1200 = vsel %vm108, %v1185, 0
  %v1203 = vsel %vm108, %v1186, 0
  %v1206 = vsel %vm108, %v1187, 0
  %v1209 = vsel %vm108, %v1188, 0
  %v1212 = vsel %vm108, %v1189, 0
  %1214 = vmatprep.subr.bf16.mxu0 0
  %1215 = vmatpush1.bf16.msra.mxu0 %v257
  %1216 = vmatprep.subr.bf16.mxu0 0
  %1217 = vmatpush1.bf16.msra.mxu0 %v258
  %1218 = vmatprep.subr.bf16.mxu0 0
  %1219 = vmatpush1.bf16.msra.mxu0 0
  %1220 = vmatprep.subr.bf16.mxu0 0
  %1221 = vmatpush1.bf16.msra.mxu0 0
  %1222 = vmatprep.subr.bf16.mxu0 0
  %1223 = vmatpush1.bf16.msra.mxu0 0
  %1224 = vmatprep.subr.bf16.mxu0 0
  %1225 = vmatpush1.bf16.msra.mxu0 0
  %1226 = vmatprep.subr.bf16.mxu0 0
  %1227 = vmatpush1.bf16.msra.mxu0 0
  %1228 = vmatprep.subr.bf16.mxu0 0
  %1229 = vmatpush1.bf16.msra.mxu0 0
  %1230 = vmatprep.subr.bf16.mxu0 0
  %1231 = vmatpush1.bf16.msra.mxu0 0
  %1232 = vmatprep.subr.bf16.mxu0 0
  %1233 = vmatpush1.bf16.msra.mxu0 0
  %1234 = vmatprep.subr.bf16.mxu0 0
  %1235 = vmatpush1.bf16.msra.mxu0 0
  %1236 = vmatprep.subr.bf16.mxu0 0
  %1237 = vmatpush1.bf16.msra.mxu0 0
  %1238 = vmatprep.subr.bf16.mxu0 0
  %1239 = vmatpush1.bf16.msra.mxu0 0
  %1240 = vmatprep.subr.bf16.mxu0 0
  %1241 = vmatpush1.bf16.msra.mxu0 0
  %1242 = vmatprep.subr.bf16.mxu0 0
  %1243 = vmatpush1.bf16.msra.mxu0 0
  %1244 = vmatprep.subr.bf16.mxu0 0
  %1245 = vmatpush1.bf16.msra.mxu0 0
  %1246 = vmatprep.mubr.bf16.mxu0 0
  %1247 = vmatmul.mubr.bf16.gmra.mrb[0].mxu0 %v1191
  %v1248 = vpop.f32.mrb[0].mxu0
  %v1249 = vadd.f32 0.0, %v1248
  %v1250 = vpop.f32.mrb[0].mxu0
  %v1251 = vpop.f32.mrb[0].mxu0
  %v1252 = vadd.f32 0.0, %v1251
  %v1253 = vpop.f32.mrb[0].mxu0
  %1254 = vmatprep.mubr.bf16.mxu0 0
  %1255 = vmatmul.mubr.bf16.gmra.mrb[0].mxu0 %v1194
  %v1256 = vpop.f32.mrb[0].mxu0
  %v1257 = vadd.f32 0.0, %v1256
  %v1258 = vpop.f32.mrb[0].mxu0
  %v1259 = vpop.f32.mrb[0].mxu0
  %v1260 = vadd.f32 0.0, %v1259
  %v1261 = vpop.f32.mrb[0].mxu0
  %1262 = vmatprep.mubr.bf16.mxu0 0
  %1263 = vmatmul.mubr.bf16.gmra.mrb[0].mxu0 %v1197
  %v1264 = vpop.f32.mrb[0].mxu0
  %v1265 = vadd.f32 0.0, %v1264
  %v1266 = vpop.f32.mrb[0].mxu0
  %v1267 = vpop.f32.mrb[0].mxu0
  %v1268 = vadd.f32 0.0, %v1267
  %v1269 = vpop.f32.mrb[0].mxu0
  %1270 = vmatprep.mubr.bf16.mxu0 0
  %1271 = vmatmul.mubr.bf16.gmra.mrb[0].mxu0 %v1200
  %v1272 = vpop.f32.mrb[0].mxu0
  %v1273 = vadd.f32 0.0, %v1272
  %v1274 = vpop.f32.mrb[0].mxu0
  %v1275 = vpop.f32.mrb[0].mxu0
  %v1276 = vadd.f32 0.0, %v1275
  %v1277 = vpop.f32.mrb[0].mxu0
  %1278 = vmatprep.mubr.bf16.mxu0 0
  %1279 = vmatmul.mubr.bf16.gmra.mrb[0].mxu0 %v1203
  %v1280 = vpop.f32.mrb[0].mxu0
  %v1281 = vadd.f32 0.0, %v1280
  %v1282 = vpop.f32.mrb[0].mxu0
  %v1283 = vpop.f32.mrb[0].mxu0
  %v1284 = vadd.f32 0.0, %v1283
  %v1285 = vpop.f32.mrb[0].mxu0
  %1286 = vmatprep.mubr.bf16.mxu0 0
  %1287 = vmatmul.mubr.bf16.gmra.mrb[0].mxu0 %v1206
  %v1288 = vpop.f32.mrb[0].mxu0
  %v1289 = vadd.f32 0.0, %v1288
  %v1290 = vpop.f32.mrb[0].mxu0
  %v1291 = vpop.f32.mrb[0].mxu0
  %v1292 = vadd.f32 0.0, %v1291
  %v1293 = vpop.f32.mrb[0].mxu0
  %1294 = vmatprep.mubr.bf16.mxu0 0
  %1295 = vmatmul.mubr.bf16.gmra.mrb[0].mxu0 %v1209
  %v1296 = vpop.f32.mrb[0].mxu0
  %v1297 = vadd.f32 0.0, %v1296
  %v1298 = vpop.f32.mrb[0].mxu0
  %v1299 = vpop.f32.mrb[0].mxu0
  %v1300 = vadd.f32 0.0, %v1299
  %v1301 = vpop.f32.mrb[0].mxu0
  %1302 = vmatprep.mubr.bf16.mxu0 0
  %1303 = vmatmul.mubr.bf16.gmra.mrb[0].mxu0 %v1212
  %v1304 = vpop.f32.mrb[0].mxu0
  %v1305 = vadd.f32 0.0, %v1304
  %v1306 = vpop.f32.mrb[0].mxu0
  %v1307 = vpop.f32.mrb[0].mxu0
  %v1308 = vadd.f32 0.0, %v1307
  %v1309 = vpop.f32.mrb[0].mxu0
  %1310 = vdwg.mxu0
  %v1311 = vpack.c.bf16 %v1252, %v1249
  %v1312 = vpack.c.bf16 %v1260, %v1257
  %v1313 = vpack.c.bf16 %v1268, %v1265
  %v1314 = vpack.c.bf16 %v1276, %v1273
  %v1315 = vpack.c.bf16 %v1284, %v1281
  %v1316 = vpack.c.bf16 %v1292, %v1289
  %v1317 = vpack.c.bf16 %v1300, %v1297
  %v1318 = vpack.c.bf16 %v1308, %v1305
  %1319 = vst.msk [vmem:[#allocation2 + $0x8] sm:$0xff] %vm108, %v1311
  %1320 = vst.msk [vmem:[#allocation2 + $0x20] sm:$0xff] %vm108, %v1312
  %1321 = vst.msk [vmem:[#allocation2 + $0x38] sm:$0xff] %vm108, %v1313
  %1322 = vst.msk [vmem:[#allocation2 + $0x50] sm:$0xff] %vm108, %v1314
  %1323 = vst.msk [vmem:[#allocation2 + $0x68] sm:$0xff] %vm108, %v1315
  %1324 = vst.msk [vmem:[#allocation2 + $0x80] sm:$0xff] %vm108, %v1316
  %1325 = vst.msk [vmem:[#allocation2 + $0x98] sm:$0xff] %vm108, %v1317
  %1326 = vst.msk [vmem:[#allocation2 + $0xb0] sm:$0xff] %vm108, %v1318
  %s1327 = scalar_lea.vmem %s3, 320
  %v1328 = vld [vmem:[%s1327] sm:$0xf]
  %v1329 = vld [vmem:[%s1327 + $0x4] sm:$0xf]
  %v1330 = vld [vmem:[%s1327 + $0x8] sm:$0xf]
  %v1331 = vld [vmem:[%s1327 + $0xc] sm:$0xf]
  %v1332 = vld [vmem:[%s1327 + $0x10] sm:$0xf]
  %v1333 = vld [vmem:[%s1327 + $0x14] sm:$0xf]
  %v1334 = vld [vmem:[%s1327 + $0x18] sm:$0xf]
  %v1335 = vld [vmem:[%s1327 + $0x1c] sm:$0xf]
  %v1336 = vld [vmem:[%s1327 + $0x20] sm:$0xf]
  %v1337 = vld [vmem:[%s1327 + $0x24] sm:$0xf]
  %v1338 = vld [vmem:[%s1327 + $0x28] sm:$0xf]
  %v1339 = vld [vmem:[%s1327 + $0x2c] sm:$0xf]
  %v1340 = vld [vmem:[%s1327 + $0x30] sm:$0xf]
  %v1341 = vld [vmem:[%s1327 + $0x34] sm:$0xf]
  %v1342 = vld [vmem:[%s1327 + $0x38] sm:$0xf]
  %v1343 = vld [vmem:[%s1327 + $0x3c] sm:$0xf]
  %v1360 = vunpack.c.l.b16 %v1328
  %v1361 = vunpack.c.l.b16 %v1329
  %v1362 = vunpack.c.l.b16 %v1330
  %v1363 = vunpack.c.l.b16 %v1331
  %v1364 = vunpack.c.l.b16 %v1332
  %v1365 = vunpack.c.l.b16 %v1333
  %v1366 = vunpack.c.l.b16 %v1334
  %v1367 = vunpack.c.l.b16 %v1335
  %v1368 = vunpack.c.l.b16 %v1336
  %v1369 = vunpack.c.l.b16 %v1337
  %v1370 = vunpack.c.l.b16 %v1338
  %v1371 = vunpack.c.l.b16 %v1339
  %v1372 = vunpack.c.l.b16 %v1340
  %v1373 = vunpack.c.l.b16 %v1341
  %v1374 = vunpack.c.l.b16 %v1342
  %v1375 = vunpack.c.l.b16 %v1343
  %v1376 = vpack.c.b16 %v1361, %v1360
  %v1377 = vpack.c.b16 %v1363, %v1362
  %v1378 = vpack.c.b16 %v1365, %v1364
  %v1379 = vpack.c.b16 %v1367, %v1366
  %v1380 = vpack.c.b16 %v1369, %v1368
  %v1381 = vpack.c.b16 %v1371, %v1370
  %v1382 = vpack.c.b16 %v1373, %v1372
  %v1383 = vpack.c.b16 %v1375, %v1374
  %v1385 = vsel %vm108, %v1376, 0
  %v1388 = vsel %vm108, %v1377, 0
  %v1391 = vsel %vm108, %v1378, 0
  %v1394 = vsel %vm108, %v1379, 0
  %v1397 = vsel %vm108, %v1380, 0
  %v1400 = vsel %vm108, %v1381, 0
  %v1403 = vsel %vm108, %v1382, 0
  %v1406 = vsel %vm108, %v1383, 0
  %1408 = vmatprep.subr.bf16.mxu0 0
  %1409 = vmatpush1.bf16.msra.mxu0 %v257
  %1410 = vmatprep.subr.bf16.mxu0 0
  %1411 = vmatpush1.bf16.msra.mxu0 %v258
  %1412 = vmatprep.subr.bf16.mxu0 0
  %1413 = vmatpush1.bf16.msra.mxu0 0
  %1414 = vmatprep.subr.bf16.mxu0 0
  %1415 = vmatpush1.bf16.msra.mxu0 0
  %1416 = vmatprep.subr.bf16.mxu0 0
  %1417 = vmatpush1.bf16.msra.mxu0 0
  %1418 = vmatprep.subr.bf16.mxu0 0
  %1419 = vmatpush1.bf16.msra.mxu0 0
  %1420 = vmatprep.subr.bf16.mxu0 0
  %1421 = vmatpush1.bf16.msra.mxu0 0
  %1422 = vmatprep.subr.bf16.mxu0 0
  %1423 = vmatpush1.bf16.msra.mxu0 0
  %1424 = vmatprep.subr.bf16.mxu0 0
  %1425 = vmatpush1.bf16.msra.mxu0 0
  %1426 = vmatprep.subr.bf16.mxu0 0
  %1427 = vmatpush1.bf16.msra.mxu0 0
  %1428 = vmatprep.subr.bf16.mxu0 0
  %1429 = vmatpush1.bf16.msra.mxu0 0
  %1430 = vmatprep.subr.bf16.mxu0 0
  %1431 = vmatpush1.bf16.msra.mxu0 0
  %1432 = vmatprep.subr.bf16.mxu0 0
  %1433 = vmatpush1.bf16.msra.mxu0 0
  %1434 = vmatprep.subr.bf16.mxu0 0
  %1435 = vmatpush1.bf16.msra.mxu0 0
  %1436 = vmatprep.subr.bf16.mxu0 0
  %1437 = vmatpush1.bf16.msra.mxu0 0
  %1438 = vmatprep.subr.bf16.mxu0 0
  %1439 = vmatpush1.bf16.msra.mxu0 0
  %1440 = vmatprep.mubr.bf16.mxu0 0
  %1441 = vmatmul.mubr.bf16.gmra.mrb[0].mxu0 %v1385
  %v1442 = vpop.f32.mrb[0].mxu0
  %v1443 = vadd.f32 0.0, %v1442
  %v1444 = vpop.f32.mrb[0].mxu0
  %v1445 = vpop.f32.mrb[0].mxu0
  %v1446 = vadd.f32 0.0, %v1445
  %v1447 = vpop.f32.mrb[0].mxu0
  %1448 = vmatprep.mubr.bf16.mxu0 0
  %1449 = vmatmul.mubr.bf16.gmra.mrb[0].mxu0 %v1388
  %v1450 = vpop.f32.mrb[0].mxu0
  %v1451 = vadd.f32 0.0, %v1450
  %v1452 = vpop.f32.mrb[0].mxu0
  %v1453 = vpop.f32.mrb[0].mxu0
  %v1454 = vadd.f32 0.0, %v1453
  %v1455 = vpop.f32.mrb[0].mxu0
  %1456 = vmatprep.mubr.bf16.mxu0 0
  %1457 = vmatmul.mubr.bf16.gmra.mrb[0].mxu0 %v1391
  %v1458 = vpop.f32.mrb[0].mxu0
  %v1459 = vadd.f32 0.0, %v1458
  %v1460 = vpop.f32.mrb[0].mxu0
  %v1461 = vpop.f32.mrb[0].mxu0
  %v1462 = vadd.f32 0.0, %v1461
  %v1463 = vpop.f32.mrb[0].mxu0
  %1464 = vmatprep.mubr.bf16.mxu0 0
  %1465 = vmatmul.mubr.bf16.gmra.mrb[0].mxu0 %v1394
  %v1466 = vpop.f32.mrb[0].mxu0
  %v1467 = vadd.f32 0.0, %v1466
  %v1468 = vpop.f32.mrb[0].mxu0
  %v1469 = vpop.f32.mrb[0].mxu0
  %v1470 = vadd.f32 0.0, %v1469
  %v1471 = vpop.f32.mrb[0].mxu0
  %1472 = vmatprep.mubr.bf16.mxu0 0
  %1473 = vmatmul.mubr.bf16.gmra.mrb[0].mxu0 %v1397
  %v1474 = vpop.f32.mrb[0].mxu0
  %v1475 = vadd.f32 0.0, %v1474
  %v1476 = vpop.f32.mrb[0].mxu0
  %v1477 = vpop.f32.mrb[0].mxu0
  %v1478 = vadd.f32 0.0, %v1477
  %v1479 = vpop.f32.mrb[0].mxu0
  %1480 = vmatprep.mubr.bf16.mxu0 0
  %1481 = vmatmul.mubr.bf16.gmra.mrb[0].mxu0 %v1400
  %v1482 = vpop.f32.mrb[0].mxu0
  %v1483 = vadd.f32 0.0, %v1482
  %v1484 = vpop.f32.mrb[0].mxu0
  %v1485 = vpop.f32.mrb[0].mxu0
  %v1486 = vadd.f32 0.0, %v1485
  %v1487 = vpop.f32.mrb[0].mxu0
  %1488 = vmatprep.mubr.bf16.mxu0 0
  %1489 = vmatmul.mubr.bf16.gmra.mrb[0].mxu0 %v1403
  %v1490 = vpop.f32.mrb[0].mxu0
  %v1491 = vadd.f32 0.0, %v1490
  %v1492 = vpop.f32.mrb[0].mxu0
  %v1493 = vpop.f32.mrb[0].mxu0
  %v1494 = vadd.f32 0.0, %v1493
  %v1495 = vpop.f32.mrb[0].mxu0
  %1496 = vmatprep.mubr.bf16.mxu0 0
  %1497 = vmatmul.mubr.bf16.gmra.mrb[0].mxu0 %v1406
  %v1498 = vpop.f32.mrb[0].mxu0
  %v1499 = vadd.f32 0.0, %v1498
  %v1500 = vpop.f32.mrb[0].mxu0
  %v1501 = vpop.f32.mrb[0].mxu0
  %v1502 = vadd.f32 0.0, %v1501
  %v1503 = vpop.f32.mrb[0].mxu0
  %1504 = vdwg.mxu0
  %v1505 = vpack.c.bf16 %v1446, %v1443
  %v1506 = vpack.c.bf16 %v1454, %v1451
  %v1507 = vpack.c.bf16 %v1462, %v1459
  %v1508 = vpack.c.bf16 %v1470, %v1467
  %v1509 = vpack.c.bf16 %v1478, %v1475
  %v1510 = vpack.c.bf16 %v1486, %v1483
  %v1511 = vpack.c.bf16 %v1494, %v1491
  %v1512 = vpack.c.bf16 %v1502, %v1499
  %1521 = vrot.lane.b32.xlu0 %v1505, 32
  %v1522 = vpop.permute.xlu0 %1521
  %1523 = vrot.lane.b32.xlu0 %v1506, 32
  %v1524 = vpop.permute.xlu0 %1523
  %1525 = vrot.lane.b32.xlu0 %v1507, 32
  %v1526 = vpop.permute.xlu0 %1525
  %1527 = vrot.lane.b32.xlu0 %v1508, 32
  %v1528 = vpop.permute.xlu0 %1527
  %1529 = vrot.lane.b32.xlu0 %v1509, 32
  %v1530 = vpop.permute.xlu0 %1529
  %1531 = vrot.lane.b32.xlu0 %v1510, 32
  %v1532 = vpop.permute.xlu0 %1531
  %1533 = vrot.lane.b32.xlu0 %v1511, 32
  %v1534 = vpop.permute.xlu0 %1533
  %1535 = vrot.lane.b32.xlu0 %v1512, 32
  %v1536 = vpop.permute.xlu0 %1535
  %1545 = vst.msk [vmem:[#allocation2 + $0x8] sm:$0xff] %vm670, %v1522
  %1546 = vst.msk [vmem:[#allocation2 + $0x20] sm:$0xff] %vm670, %v1524
  %1547 = vst.msk [vmem:[#allocation2 + $0x38] sm:$0xff] %vm670, %v1526
  %1548 = vst.msk [vmem:[#allocation2 + $0x50] sm:$0xff] %vm670, %v1528
  %1549 = vst.msk [vmem:[#allocation2 + $0x68] sm:$0xff] %vm670, %v1530
  %1550 = vst.msk [vmem:[#allocation2 + $0x80] sm:$0xff] %vm670, %v1532
  %1551 = vst.msk [vmem:[#allocation2 + $0x98] sm:$0xff] %vm670, %v1534
  %1552 = vst.msk [vmem:[#allocation2 + $0xb0] sm:$0xff] %vm670, %v1536
  %s1553 = scalar_lea.vmem %s3, 384
  %v1554 = vld [vmem:[%s1553] sm:$0xf]
  %v1555 = vld [vmem:[%s1553 + $0x4] sm:$0xf]
  %v1556 = vld [vmem:[%s1553 + $0x8] sm:$0xf]
  %v1557 = vld [vmem:[%s1553 + $0xc] sm:$0xf]
  %v1558 = vld [vmem:[%s1553 + $0x10] sm:$0xf]
  %v1559 = vld [vmem:[%s1553 + $0x14] sm:$0xf]
  %v1560 = vld [vmem:[%s1553 + $0x18] sm:$0xf]
  %v1561 = vld [vmem:[%s1553 + $0x1c] sm:$0xf]
  %v1562 = vld [vmem:[%s1553 + $0x20] sm:$0xf]
  %v1563 = vld [vmem:[%s1553 + $0x24] sm:$0xf]
  %v1564 = vld [vmem:[%s1553 + $0x28] sm:$0xf]
  %v1565 = vld [vmem:[%s1553 + $0x2c] sm:$0xf]
  %v1566 = vld [vmem:[%s1553 + $0x30] sm:$0xf]
  %v1567 = vld [vmem:[%s1553 + $0x34] sm:$0xf]
  %v1568 = vld [vmem:[%s1553 + $0x38] sm:$0xf]
  %v1569 = vld [vmem:[%s1553 + $0x3c] sm:$0xf]
  %v1586 = vunpack.c.l.b16 %v1554
  %v1587 = vunpack.c.l.b16 %v1555
  %v1588 = vunpack.c.l.b16 %v1556
  %v1589 = vunpack.c.l.b16 %v1557
  %v1590 = vunpack.c.l.b16 %v1558
  %v1591 = vunpack.c.l.b16 %v1559
  %v1592 = vunpack.c.l.b16 %v1560
  %v1593 = vunpack.c.l.b16 %v1561
  %v1594 = vunpack.c.l.b16 %v1562
  %v1595 = vunpack.c.l.b16 %v1563
  %v1596 = vunpack.c.l.b16 %v1564
  %v1597 = vunpack.c.l.b16 %v1565
  %v1598 = vunpack.c.l.b16 %v1566
  %v1599 = vunpack.c.l.b16 %v1567
  %v1600 = vunpack.c.l.b16 %v1568
  %v1601 = vunpack.c.l.b16 %v1569
  %v1602 = vpack.c.b16 %v1587, %v1586
  %v1603 = vpack.c.b16 %v1589, %v1588
  %v1604 = vpack.c.b16 %v1591, %v1590
  %v1605 = vpack.c.b16 %v1593, %v1592
  %v1606 = vpack.c.b16 %v1595, %v1594
  %v1607 = vpack.c.b16 %v1597, %v1596
  %v1608 = vpack.c.b16 %v1599, %v1598
  %v1609 = vpack.c.b16 %v1601, %v1600
  %v1611 = vsel %vm108, %v1602, 0
  %v1614 = vsel %vm108, %v1603, 0
  %v1617 = vsel %vm108, %v1604, 0
  %v1620 = vsel %vm108, %v1605, 0
  %v1623 = vsel %vm108, %v1606, 0
  %v1626 = vsel %vm108, %v1607, 0
  %v1629 = vsel %vm108, %v1608, 0
  %v1632 = vsel %vm108, %v1609, 0
  %1634 = vmatprep.subr.bf16.mxu0 0
  %1635 = vmatpush1.bf16.msra.mxu0 %v257
  %1636 = vmatprep.subr.bf16.mxu0 0
  %1637 = vmatpush1.bf16.msra.mxu0 %v258
  %1638 = vmatprep.subr.bf16.mxu0 0
  %1639 = vmatpush1.bf16.msra.mxu0 0
  %1640 = vmatprep.subr.bf16.mxu0 0
  %1641 = vmatpush1.bf16.msra.mxu0 0
  %1642 = vmatprep.subr.bf16.mxu0 0
  %1643 = vmatpush1.bf16.msra.mxu0 0
  %1644 = vmatprep.subr.bf16.mxu0 0
  %1645 = vmatpush1.bf16.msra.mxu0 0
  %1646 = vmatprep.subr.bf16.mxu0 0
  %1647 = vmatpush1.bf16.msra.mxu0 0
  %1648 = vmatprep.subr.bf16.mxu0 0
  %1649 = vmatpush1.bf16.msra.mxu0 0
  %1650 = vmatprep.subr.bf16.mxu0 0
  %1651 = vmatpush1.bf16.msra.mxu0 0
  %1652 = vmatprep.subr.bf16.mxu0 0
  %1653 = vmatpush1.bf16.msra.mxu0 0
  %1654 = vmatprep.subr.bf16.mxu0 0
  %1655 = vmatpush1.bf16.msra.mxu0 0
  %1656 = vmatprep.subr.bf16.mxu0 0
  %1657 = vmatpush1.bf16.msra.mxu0 0
  %1658 = vmatprep.subr.bf16.mxu0 0
  %1659 = vmatpush1.bf16.msra.mxu0 0
  %1660 = vmatprep.subr.bf16.mxu0 0
  %1661 = vmatpush1.bf16.msra.mxu0 0
  %1662 = vmatprep.subr.bf16.mxu0 0
  %1663 = vmatpush1.bf16.msra.mxu0 0
  %1664 = vmatprep.subr.bf16.mxu0 0
  %1665 = vmatpush1.bf16.msra.mxu0 0
  %1666 = vmatprep.mubr.bf16.mxu0 0
  %1667 = vmatmul.mubr.bf16.gmra.mrb[0].mxu0 %v1611
  %v1668 = vpop.f32.mrb[0].mxu0
  %v1669 = vadd.f32 0.0, %v1668
  %v1670 = vpop.f32.mrb[0].mxu0
  %v1671 = vpop.f32.mrb[0].mxu0
  %v1672 = vadd.f32 0.0, %v1671
  %v1673 = vpop.f32.mrb[0].mxu0
  %1674 = vmatprep.mubr.bf16.mxu0 0
  %1675 = vmatmul.mubr.bf16.gmra.mrb[0].mxu0 %v1614
  %v1676 = vpop.f32.mrb[0].mxu0
  %v1677 = vadd.f32 0.0, %v1676
  %v1678 = vpop.f32.mrb[0].mxu0
  %v1679 = vpop.f32.mrb[0].mxu0
  %v1680 = vadd.f32 0.0, %v1679
  %v1681 = vpop.f32.mrb[0].mxu0
  %1682 = vmatprep.mubr.bf16.mxu0 0
  %1683 = vmatmul.mubr.bf16.gmra.mrb[0].mxu0 %v1617
  %v1684 = vpop.f32.mrb[0].mxu0
  %v1685 = vadd.f32 0.0, %v1684
  %v1686 = vpop.f32.mrb[0].mxu0
  %v1687 = vpop.f32.mrb[0].mxu0
  %v1688 = vadd.f32 0.0, %v1687
  %v1689 = vpop.f32.mrb[0].mxu0
  %1690 = vmatprep.mubr.bf16.mxu0 0
  %1691 = vmatmul.mubr.bf16.gmra.mrb[0].mxu0 %v1620
  %v1692 = vpop.f32.mrb[0].mxu0
  %v1693 = vadd.f32 0.0, %v1692
  %v1694 = vpop.f32.mrb[0].mxu0
  %v1695 = vpop.f32.mrb[0].mxu0
  %v1696 = vadd.f32 0.0, %v1695
  %v1697 = vpop.f32.mrb[0].mxu0
  %1698 = vmatprep.mubr.bf16.mxu0 0
  %1699 = vmatmul.mubr.bf16.gmra.mrb[0].mxu0 %v1623
  %v1700 = vpop.f32.mrb[0].mxu0
  %v1701 = vadd.f32 0.0, %v1700
  %v1702 = vpop.f32.mrb[0].mxu0
  %v1703 = vpop.f32.mrb[0].mxu0
  %v1704 = vadd.f32 0.0, %v1703
  %v1705 = vpop.f32.mrb[0].mxu0
  %1706 = vmatprep.mubr.bf16.mxu0 0
  %1707 = vmatmul.mubr.bf16.gmra.mrb[0].mxu0 %v1626
  %v1708 = vpop.f32.mrb[0].mxu0
  %v1709 = vadd.f32 0.0, %v1708
  %v1710 = vpop.f32.mrb[0].mxu0
  %v1711 = vpop.f32.mrb[0].mxu0
  %v1712 = vadd.f32 0.0, %v1711
  %v1713 = vpop.f32.mrb[0].mxu0
  %1714 = vmatprep.mubr.bf16.mxu0 0
  %1715 = vmatmul.mubr.bf16.gmra.mrb[0].mxu0 %v1629
  %v1716 = vpop.f32.mrb[0].mxu0
  %v1717 = vadd.f32 0.0, %v1716
  %v1718 = vpop.f32.mrb[0].mxu0
  %v1719 = vpop.f32.mrb[0].mxu0
  %v1720 = vadd.f32 0.0, %v1719
  %v1721 = vpop.f32.mrb[0].mxu0
  %1722 = vmatprep.mubr.bf16.mxu0 0
  %1723 = vmatmul.mubr.bf16.gmra.mrb[0].mxu0 %v1632
  %v1724 = vpop.f32.mrb[0].mxu0
  %v1725 = vadd.f32 0.0, %v1724
  %v1726 = vpop.f32.mrb[0].mxu0
  %v1727 = vpop.f32.mrb[0].mxu0
  %v1728 = vadd.f32 0.0, %v1727
  %v1729 = vpop.f32.mrb[0].mxu0
  %1730 = vdwg.mxu0
  %v1731 = vpack.c.bf16 %v1672, %v1669
  %v1732 = vpack.c.bf16 %v1680, %v1677
  %v1733 = vpack.c.bf16 %v1688, %v1685
  %v1734 = vpack.c.bf16 %v1696, %v1693
  %v1735 = vpack.c.bf16 %v1704, %v1701
  %v1736 = vpack.c.bf16 %v1712, %v1709
  %v1737 = vpack.c.bf16 %v1720, %v1717
  %v1738 = vpack.c.bf16 %v1728, %v1725
  %1747 = vrot.lane.b32.xlu0 %v1731, 64
  %v1748 = vpop.permute.xlu0 %1747
  %1749 = vrot.lane.b32.xlu0 %v1732, 64
  %v1750 = vpop.permute.xlu0 %1749
  %1751 = vrot.lane.b32.xlu0 %v1733, 64
  %v1752 = vpop.permute.xlu0 %1751
  %1753 = vrot.lane.b32.xlu0 %v1734, 64
  %v1754 = vpop.permute.xlu0 %1753
  %1755 = vrot.lane.b32.xlu0 %v1735, 64
  %v1756 = vpop.permute.xlu0 %1755
  %1757 = vrot.lane.b32.xlu0 %v1736, 64
  %v1758 = vpop.permute.xlu0 %1757
  %1759 = vrot.lane.b32.xlu0 %v1737, 64
  %v1760 = vpop.permute.xlu0 %1759
  %1761 = vrot.lane.b32.xlu0 %v1738, 64
  %v1762 = vpop.permute.xlu0 %1761
  %1771 = vst.msk [vmem:[#allocation2 + $0x8] sm:$0xff] %vm897, %v1748
  %1772 = vst.msk [vmem:[#allocation2 + $0x20] sm:$0xff] %vm897, %v1750
  %1773 = vst.msk [vmem:[#allocation2 + $0x38] sm:$0xff] %vm897, %v1752
  %1774 = vst.msk [vmem:[#allocation2 + $0x50] sm:$0xff] %vm897, %v1754
  %1775 = vst.msk [vmem:[#allocation2 + $0x68] sm:$0xff] %vm897, %v1756
  %1776 = vst.msk [vmem:[#allocation2 + $0x80] sm:$0xff] %vm897, %v1758
  %1777 = vst.msk [vmem:[#allocation2 + $0x98] sm:$0xff] %vm897, %v1760
  %1778 = vst.msk [vmem:[#allocation2 + $0xb0] sm:$0xff] %vm897, %v1762
  %s1779 = scalar_lea.vmem %s3, 448
  %v1780 = vld [vmem:[%s1779] sm:$0xf]
  %v1781 = vld [vmem:[%s1779 + $0x4] sm:$0xf]
  %v1782 = vld [vmem:[%s1779 + $0x8] sm:$0xf]
  %v1783 = vld [vmem:[%s1779 + $0xc] sm:$0xf]
  %v1784 = vld [vmem:[%s1779 + $0x10] sm:$0xf]
  %v1785 = vld [vmem:[%s1779 + $0x14] sm:$0xf]
  %v1786 = vld [vmem:[%s1779 + $0x18] sm:$0xf]
  %v1787 = vld [vmem:[%s1779 + $0x1c] sm:$0xf]
  %v1788 = vld [vmem:[%s1779 + $0x20] sm:$0xf]
  %v1789 = vld [vmem:[%s1779 + $0x24] sm:$0xf]
  %v1790 = vld [vmem:[%s1779 + $0x28] sm:$0xf]
  %v1791 = vld [vmem:[%s1779 + $0x2c] sm:$0xf]
  %v1792 = vld [vmem:[%s1779 + $0x30] sm:$0xf]
  %v1793 = vld [vmem:[%s1779 + $0x34] sm:$0xf]
  %v1794 = vld [vmem:[%s1779 + $0x38] sm:$0xf]
  %v1795 = vld [vmem:[%s1779 + $0x3c] sm:$0xf]
  %v1812 = vunpack.c.l.b16 %v1780
  %v1813 = vunpack.c.l.b16 %v1781
  %v1814 = vunpack.c.l.b16 %v1782
  %v1815 = vunpack.c.l.b16 %v1783
  %v1816 = vunpack.c.l.b16 %v1784
  %v1817 = vunpack.c.l.b16 %v1785
  %v1818 = vunpack.c.l.b16 %v1786
  %v1819 = vunpack.c.l.b16 %v1787
  %v1820 = vunpack.c.l.b16 %v1788
  %v1821 = vunpack.c.l.b16 %v1789
  %v1822 = vunpack.c.l.b16 %v1790
  %v1823 = vunpack.c.l.b16 %v1791
  %v1824 = vunpack.c.l.b16 %v1792
  %v1825 = vunpack.c.l.b16 %v1793
  %v1826 = vunpack.c.l.b16 %v1794
  %v1827 = vunpack.c.l.b16 %v1795
  %v1828 = vpack.c.b16 %v1813, %v1812
  %v1829 = vpack.c.b16 %v1815, %v1814
  %v1830 = vpack.c.b16 %v1817, %v1816
  %v1831 = vpack.c.b16 %v1819, %v1818
  %v1832 = vpack.c.b16 %v1821, %v1820
  %v1833 = vpack.c.b16 %v1823, %v1822
  %v1834 = vpack.c.b16 %v1825, %v1824
  %v1835 = vpack.c.b16 %v1827, %v1826
  %v1837 = vsel %vm108, %v1828, 0
  %v1840 = vsel %vm108, %v1829, 0
  %v1843 = vsel %vm108, %v1830, 0
  %v1846 = vsel %vm108, %v1831, 0
  %v1849 = vsel %vm108, %v1832, 0
  %v1852 = vsel %vm108, %v1833, 0
  %v1855 = vsel %vm108, %v1834, 0
  %v1858 = vsel %vm108, %v1835, 0
  %1860 = vmatprep.subr.bf16.mxu0 0
  %1861 = vmatpush1.bf16.msra.mxu0 %v257
  %1862 = vmatprep.subr.bf16.mxu0 0
  %1863 = vmatpush1.bf16.msra.mxu0 %v258
  %1864 = vmatprep.subr.bf16.mxu0 0
  %1865 = vmatpush1.bf16.msra.mxu0 0
  %1866 = vmatprep.subr.bf16.mxu0 0
  %1867 = vmatpush1.bf16.msra.mxu0 0
  %1868 = vmatprep.subr.bf16.mxu0 0
  %1869 = vmatpush1.bf16.msra.mxu0 0
  %1870 = vmatprep.subr.bf16.mxu0 0
  %1871 = vmatpush1.bf16.msra.mxu0 0
  %1872 = vmatprep.subr.bf16.mxu0 0
  %1873 = vmatpush1.bf16.msra.mxu0 0
  %1874 = vmatprep.subr.bf16.mxu0 0
  %1875 = vmatpush1.bf16.msra.mxu0 0
  %1876 = vmatprep.subr.bf16.mxu0 0
  %1877 = vmatpush1.bf16.msra.mxu0 0
  %1878 = vmatprep.subr.bf16.mxu0 0
  %1879 = vmatpush1.bf16.msra.mxu0 0
  %1880 = vmatprep.subr.bf16.mxu0 0
  %1881 = vmatpush1.bf16.msra.mxu0 0
  %1882 = vmatprep.subr.bf16.mxu0 0
  %1883 = vmatpush1.bf16.msra.mxu0 0
  %1884 = vmatprep.subr.bf16.mxu0 0
  %1885 = vmatpush1.bf16.msra.mxu0 0
  %1886 = vmatprep.subr.bf16.mxu0 0
  %1887 = vmatpush1.bf16.msra.mxu0 0
  %1888 = vmatprep.subr.bf16.mxu0 0
  %1889 = vmatpush1.bf16.msra.mxu0 0
  %1890 = vmatprep.subr.bf16.mxu0 0
  %1891 = vmatpush1.bf16.msra.mxu0 0
  %1892 = vmatprep.mubr.bf16.mxu0 0
  %1893 = vmatmul.mubr.bf16.gmra.mrb[0].mxu0 %v1837
  %v1894 = vpop.f32.mrb[0].mxu0
  %v1895 = vadd.f32 0.0, %v1894
  %v1896 = vpop.f32.mrb[0].mxu0
  %v1897 = vpop.f32.mrb[0].mxu0
  %v1898 = vadd.f32 0.0, %v1897
  %v1899 = vpop.f32.mrb[0].mxu0
  %1900 = vmatprep.mubr.bf16.mxu0 0
  %1901 = vmatmul.mubr.bf16.gmra.mrb[0].mxu0 %v1840
  %v1902 = vpop.f32.mrb[0].mxu0
  %v1903 = vadd.f32 0.0, %v1902
  %v1904 = vpop.f32.mrb[0].mxu0
  %v1905 = vpop.f32.mrb[0].mxu0
  %v1906 = vadd.f32 0.0, %v1905
  %v1907 = vpop.f32.mrb[0].mxu0
  %1908 = vmatprep.mubr.bf16.mxu0 0
  %1909 = vmatmul.mubr.bf16.gmra.mrb[0].mxu0 %v1843
  %v1910 = vpop.f32.mrb[0].mxu0
  %v1911 = vadd.f32 0.0, %v1910
  %v1912 = vpop.f32.mrb[0].mxu0
  %v1913 = vpop.f32.mrb[0].mxu0
  %v1914 = vadd.f32 0.0, %v1913
  %v1915 = vpop.f32.mrb[0].mxu0
  %1916 = vmatprep.mubr.bf16.mxu0 0
  %1917 = vmatmul.mubr.bf16.gmra.mrb[0].mxu0 %v1846
  %v1918 = vpop.f32.mrb[0].mxu0
  %v1919 = vadd.f32 0.0, %v1918
  %v1920 = vpop.f32.mrb[0].mxu0
  %v1921 = vpop.f32.mrb[0].mxu0
  %v1922 = vadd.f32 0.0, %v1921
  %v1923 = vpop.f32.mrb[0].mxu0
  %1924 = vmatprep.mubr.bf16.mxu0 0
  %1925 = vmatmul.mubr.bf16.gmra.mrb[0].mxu0 %v1849
  %v1926 = vpop.f32.mrb[0].mxu0
  %v1927 = vadd.f32 0.0, %v1926
  %v1928 = vpop.f32.mrb[0].mxu0
  %v1929 = vpop.f32.mrb[0].mxu0
  %v1930 = vadd.f32 0.0, %v1929
  %v1931 = vpop.f32.mrb[0].mxu0
  %1932 = vmatprep.mubr.bf16.mxu0 0
  %1933 = vmatmul.mubr.bf16.gmra.mrb[0].mxu0 %v1852
  %v1934 = vpop.f32.mrb[0].mxu0
  %v1935 = vadd.f32 0.0, %v1934
  %v1936 = vpop.f32.mrb[0].mxu0
  %v1937 = vpop.f32.mrb[0].mxu0
  %v1938 = vadd.f32 0.0, %v1937
  %v1939 = vpop.f32.mrb[0].mxu0
  %1940 = vmatprep.mubr.bf16.mxu0 0
  %1941 = vmatmul.mubr.bf16.gmra.mrb[0].mxu0 %v1855
  %v1942 = vpop.f32.mrb[0].mxu0
  %v1943 = vadd.f32 0.0, %v1942
  %v1944 = vpop.f32.mrb[0].mxu0
  %v1945 = vpop.f32.mrb[0].mxu0
  %v1946 = vadd.f32 0.0, %v1945
  %v1947 = vpop.f32.mrb[0].mxu0
  %1948 = vmatprep.mubr.bf16.mxu0 0
  %1949 = vmatmul.mubr.bf16.gmra.mrb[0].mxu0 %v1858
  %v1950 = vpop.f32.mrb[0].mxu0
  %v1951 = vadd.f32 0.0, %v1950
  %v1952 = vpop.f32.mrb[0].mxu0
  %v1953 = vpop.f32.mrb[0].mxu0
  %v1954 = vadd.f32 0.0, %v1953
  %v1955 = vpop.f32.mrb[0].mxu0
  %1956 = vdwg.mxu0
  %v1957 = vpack.c.bf16 %v1898, %v1895
  %v1958 = vpack.c.bf16 %v1906, %v1903
  %v1959 = vpack.c.bf16 %v1914, %v1911
  %v1960 = vpack.c.bf16 %v1922, %v1919
  %v1961 = vpack.c.bf16 %v1930, %v1927
  %v1962 = vpack.c.bf16 %v1938, %v1935
  %v1963 = vpack.c.bf16 %v1946, %v1943
  %v1964 = vpack.c.bf16 %v1954, %v1951
  %1973 = vrot.lane.b32.xlu0 %v1957, 96
  %v1974 = vpop.permute.xlu0 %1973
  %1975 = vrot.lane.b32.xlu0 %v1958, 96
  %v1976 = vpop.permute.xlu0 %1975
  %1977 = vrot.lane.b32.xlu0 %v1959, 96
  %v1978 = vpop.permute.xlu0 %1977
  %1979 = vrot.lane.b32.xlu0 %v1960, 96
  %v1980 = vpop.permute.xlu0 %1979
  %1981 = vrot.lane.b32.xlu0 %v1961, 96
  %v1982 = vpop.permute.xlu0 %1981
  %1983 = vrot.lane.b32.xlu0 %v1962, 96
  %v1984 = vpop.permute.xlu0 %1983
  %1985 = vrot.lane.b32.xlu0 %v1963, 96
  %v1986 = vpop.permute.xlu0 %1985
  %1987 = vrot.lane.b32.xlu0 %v1964, 96
  %v1988 = vpop.permute.xlu0 %1987
  %1997 = vst.msk [vmem:[#allocation2 + $0x8] sm:$0xff] %vm1124, %v1974
  %1998 = vst.msk [vmem:[#allocation2 + $0x20] sm:$0xff] %vm1124, %v1976
  %1999 = vst.msk [vmem:[#allocation2 + $0x38] sm:$0xff] %vm1124, %v1978
  %2000 = vst.msk [vmem:[#allocation2 + $0x50] sm:$0xff] %vm1124, %v1980
  %2001 = vst.msk [vmem:[#allocation2 + $0x68] sm:$0xff] %vm1124, %v1982
  %2002 = vst.msk [vmem:[#allocation2 + $0x80] sm:$0xff] %vm1124, %v1984
  %2003 = vst.msk [vmem:[#allocation2 + $0x98] sm:$0xff] %vm1124, %v1986
  %2004 = vst.msk [vmem:[#allocation2 + $0xb0] sm:$0xff] %vm1124, %v1988
  %s2005 = scalar_lea.vmem %s3, 512
  %v2006 = vld [vmem:[%s2005] sm:$0xf]
  %v2007 = vld [vmem:[%s2005 + $0x4] sm:$0xf]
  %v2008 = vld [vmem:[%s2005 + $0x8] sm:$0xf]
  %v2009 = vld [vmem:[%s2005 + $0xc] sm:$0xf]
  %v2010 = vld [vmem:[%s2005 + $0x10] sm:$0xf]
  %v2011 = vld [vmem:[%s2005 + $0x14] sm:$0xf]
  %v2012 = vld [vmem:[%s2005 + $0x18] sm:$0xf]
  %v2013 = vld [vmem:[%s2005 + $0x1c] sm:$0xf]
  %v2014 = vld [vmem:[%s2005 + $0x20] sm:$0xf]
  %v2015 = vld [vmem:[%s2005 + $0x24] sm:$0xf]
  %v2016 = vld [vmem:[%s2005 + $0x28] sm:$0xf]
  %v2017 = vld [vmem:[%s2005 + $0x2c] sm:$0xf]
  %v2018 = vld [vmem:[%s2005 + $0x30] sm:$0xf]
  %v2019 = vld [vmem:[%s2005 + $0x34] sm:$0xf]
  %v2020 = vld [vmem:[%s2005 + $0x38] sm:$0xf]
  %v2021 = vld [vmem:[%s2005 + $0x3c] sm:$0xf]
  %v2038 = vunpack.c.l.b16 %v2006
  %v2039 = vunpack.c.l.b16 %v2007
  %v2040 = vunpack.c.l.b16 %v2008
  %v2041 = vunpack.c.l.b16 %v2009
  %v2042 = vunpack.c.l.b16 %v2010
  %v2043 = vunpack.c.l.b16 %v2011
  %v2044 = vunpack.c.l.b16 %v2012
  %v2045 = vunpack.c.l.b16 %v2013
  %v2046 = vunpack.c.l.b16 %v2014
  %v2047 = vunpack.c.l.b16 %v2015
  %v2048 = vunpack.c.l.b16 %v2016
  %v2049 = vunpack.c.l.b16 %v2017
  %v2050 = vunpack.c.l.b16 %v2018
  %v2051 = vunpack.c.l.b16 %v2019
  %v2052 = vunpack.c.l.b16 %v2020
  %v2053 = vunpack.c.l.b16 %v2021
  %v2054 = vpack.c.b16 %v2039, %v2038
  %v2055 = vpack.c.b16 %v2041, %v2040
  %v2056 = vpack.c.b16 %v2043, %v2042
  %v2057 = vpack.c.b16 %v2045, %v2044
  %v2058 = vpack.c.b16 %v2047, %v2046
  %v2059 = vpack.c.b16 %v2049, %v2048
  %v2060 = vpack.c.b16 %v2051, %v2050
  %v2061 = vpack.c.b16 %v2053, %v2052
  %v2063 = vsel %vm108, %v2054, 0
  %v2066 = vsel %vm108, %v2055, 0
  %v2069 = vsel %vm108, %v2056, 0
  %v2072 = vsel %vm108, %v2057, 0
  %v2075 = vsel %vm108, %v2058, 0
  %v2078 = vsel %vm108, %v2059, 0
  %v2081 = vsel %vm108, %v2060, 0
  %v2084 = vsel %vm108, %v2061, 0
  %2086 = vmatprep.subr.bf16.mxu0 0
  %2087 = vmatpush1.bf16.msra.mxu0 %v257
  %2088 = vmatprep.subr.bf16.mxu0 0
  %2089 = vmatpush1.bf16.msra.mxu0 %v258
  %2090 = vmatprep.subr.bf16.mxu0 0
  %2091 = vmatpush1.bf16.msra.mxu0 0
  %2092 = vmatprep.subr.bf16.mxu0 0
  %2093 = vmatpush1.bf16.msra.mxu0 0
  %2094 = vmatprep.subr.bf16.mxu0 0
  %2095 = vmatpush1.bf16.msra.mxu0 0
  %2096 = vmatprep.subr.bf16.mxu0 0
  %2097 = vmatpush1.bf16.msra.mxu0 0
  %2098 = vmatprep.subr.bf16.mxu0 0
  %2099 = vmatpush1.bf16.msra.mxu0 0
  %2100 = vmatprep.subr.bf16.mxu0 0
  %2101 = vmatpush1.bf16.msra.mxu0 0
  %2102 = vmatprep.subr.bf16.mxu0 0
  %2103 = vmatpush1.bf16.msra.mxu0 0
  %2104 = vmatprep.subr.bf16.mxu0 0
  %2105 = vmatpush1.bf16.msra.mxu0 0
  %2106 = vmatprep.subr.bf16.mxu0 0
  %2107 = vmatpush1.bf16.msra.mxu0 0
  %2108 = vmatprep.subr.bf16.mxu0 0
  %2109 = vmatpush1.bf16.msra.mxu0 0
  %2110 = vmatprep.subr.bf16.mxu0 0
  %2111 = vmatpush1.bf16.msra.mxu0 0
  %2112 = vmatprep.subr.bf16.mxu0 0
  %2113 = vmatpush1.bf16.msra.mxu0 0
  %2114 = vmatprep.subr.bf16.mxu0 0
  %2115 = vmatpush1.bf16.msra.mxu0 0
  %2116 = vmatprep.subr.bf16.mxu0 0
  %2117 = vmatpush1.bf16.msra.mxu0 0
  %2118 = vmatprep.mubr.bf16.mxu0 0
  %2119 = vmatmul.mubr.bf16.gmra.mrb[0].mxu0 %v2063
  %v2120 = vpop.f32.mrb[0].mxu0
  %v2121 = vadd.f32 0.0, %v2120
  %v2122 = vpop.f32.mrb[0].mxu0
  %v2123 = vpop.f32.mrb[0].mxu0
  %v2124 = vadd.f32 0.0, %v2123
  %v2125 = vpop.f32.mrb[0].mxu0
  %2126 = vmatprep.mubr.bf16.mxu0 0
  %2127 = vmatmul.mubr.bf16.gmra.mrb[0].mxu0 %v2066
  %v2128 = vpop.f32.mrb[0].mxu0
  %v2129 = vadd.f32 0.0, %v2128
  %v2130 = vpop.f32.mrb[0].mxu0
  %v2131 = vpop.f32.mrb[0].mxu0
  %v2132 = vadd.f32 0.0, %v2131
  %v2133 = vpop.f32.mrb[0].mxu0
  %2134 = vmatprep.mubr.bf16.mxu0 0
  %2135 = vmatmul.mubr.bf16.gmra.mrb[0].mxu0 %v2069
  %v2136 = vpop.f32.mrb[0].mxu0
  %v2137 = vadd.f32 0.0, %v2136
  %v2138 = vpop.f32.mrb[0].mxu0
  %v2139 = vpop.f32.mrb[0].mxu0
  %v2140 = vadd.f32 0.0, %v2139
  %v2141 = vpop.f32.mrb[0].mxu0
  %2142 = vmatprep.mubr.bf16.mxu0 0
  %2143 = vmatmul.mubr.bf16.gmra.mrb[0].mxu0 %v2072
  %v2144 = vpop.f32.mrb[0].mxu0
  %v2145 = vadd.f32 0.0, %v2144
  %v2146 = vpop.f32.mrb[0].mxu0
  %v2147 = vpop.f32.mrb[0].mxu0
  %v2148 = vadd.f32 0.0, %v2147
  %v2149 = vpop.f32.mrb[0].mxu0
  %2150 = vmatprep.mubr.bf16.mxu0 0
  %2151 = vmatmul.mubr.bf16.gmra.mrb[0].mxu0 %v2075
  %v2152 = vpop.f32.mrb[0].mxu0
  %v2153 = vadd.f32 0.0, %v2152
  %v2154 = vpop.f32.mrb[0].mxu0
  %v2155 = vpop.f32.mrb[0].mxu0
  %v2156 = vadd.f32 0.0, %v2155
  %v2157 = vpop.f32.mrb[0].mxu0
  %2158 = vmatprep.mubr.bf16.mxu0 0
  %2159 = vmatmul.mubr.bf16.gmra.mrb[0].mxu0 %v2078
  %v2160 = vpop.f32.mrb[0].mxu0
  %v2161 = vadd.f32 0.0, %v2160
  %v2162 = vpop.f32.mrb[0].mxu0
  %v2163 = vpop.f32.mrb[0].mxu0
  %v2164 = vadd.f32 0.0, %v2163
  %v2165 = vpop.f32.mrb[0].mxu0
  %2166 = vmatprep.mubr.bf16.mxu0 0
  %2167 = vmatmul.mubr.bf16.gmra.mrb[0].mxu0 %v2081
  %v2168 = vpop.f32.mrb[0].mxu0
  %v2169 = vadd.f32 0.0, %v2168
  %v2170 = vpop.f32.mrb[0].mxu0
  %v2171 = vpop.f32.mrb[0].mxu0
  %v2172 = vadd.f32 0.0, %v2171
  %v2173 = vpop.f32.mrb[0].mxu0
  %2174 = vmatprep.mubr.bf16.mxu0 0
  %2175 = vmatmul.mubr.bf16.gmra.mrb[0].mxu0 %v2084
  %v2176 = vpop.f32.mrb[0].mxu0
  %v2177 = vadd.f32 0.0, %v2176
  %v2178 = vpop.f32.mrb[0].mxu0
  %v2179 = vpop.f32.mrb[0].mxu0
  %v2180 = vadd.f32 0.0, %v2179
  %v2181 = vpop.f32.mrb[0].mxu0
  %2182 = vdwg.mxu0
  %v2183 = vpack.c.bf16 %v2124, %v2121
  %v2184 = vpack.c.bf16 %v2132, %v2129
  %v2185 = vpack.c.bf16 %v2140, %v2137
  %v2186 = vpack.c.bf16 %v2148, %v2145
  %v2187 = vpack.c.bf16 %v2156, %v2153
  %v2188 = vpack.c.bf16 %v2164, %v2161
  %v2189 = vpack.c.bf16 %v2172, %v2169
  %v2190 = vpack.c.bf16 %v2180, %v2177
  %2191 = vst.msk [vmem:[#allocation2 + $0x10] sm:$0xff] %vm108, %v2183
  %2192 = vst.msk [vmem:[#allocation2 + $0x28] sm:$0xff] %vm108, %v2184
  %2193 = vst.msk [vmem:[#allocation2 + $0x40] sm:$0xff] %vm108, %v2185
  %2194 = vst.msk [vmem:[#allocation2 + $0x58] sm:$0xff] %vm108, %v2186
  %2195 = vst.msk [vmem:[#allocation2 + $0x70] sm:$0xff] %vm108, %v2187
  %2196 = vst.msk [vmem:[#allocation2 + $0x88] sm:$0xff] %vm108, %v2188
  %2197 = vst.msk [vmem:[#allocation2 + $0xa0] sm:$0xff] %vm108, %v2189
  %2198 = vst.msk [vmem:[#allocation2 + $0xb8] sm:$0xff] %vm108, %v2190
  %v2199 = vld [vmem:[#allocation2] sm:$0xff]
  %v2200 = vld [vmem:[#allocation2 + $0x8] sm:$0xff]
  %v2201 = vld [vmem:[#allocation2 + $0x10] sm:$0xff]
  %v2202 = vld [vmem:[#allocation2 + $0x18] sm:$0xff]
  %v2203 = vld [vmem:[#allocation2 + $0x20] sm:$0xff]
  %v2204 = vld [vmem:[#allocation2 + $0x28] sm:$0xff]
  %v2205 = vld [vmem:[#allocation2 + $0x30] sm:$0xff]
  %v2206 = vld [vmem:[#allocation2 + $0x38] sm:$0xff]
  %v2207 = vld [vmem:[#allocation2 + $0x40] sm:$0xff]
  %v2208 = vld [vmem:[#allocation2 + $0x48] sm:$0xff]
  %v2209 = vld [vmem:[#allocation2 + $0x50] sm:$0xff]
  %v2210 = vld [vmem:[#allocation2 + $0x58] sm:$0xff]
  %v2211 = vld [vmem:[#allocation2 + $0x60] sm:$0xff]
  %v2212 = vld [vmem:[#allocation2 + $0x68] sm:$0xff]
  %v2213 = vld [vmem:[#allocation2 + $0x70] sm:$0xff]
  %v2214 = vld [vmem:[#allocation2 + $0x78] sm:$0xff]
  %v2215 = vld [vmem:[#allocation2 + $0x80] sm:$0xff]
  %v2216 = vld [vmem:[#allocation2 + $0x88] sm:$0xff]
  %v2217 = vld [vmem:[#allocation2 + $0x90] sm:$0xff]
  %v2218 = vld [vmem:[#allocation2 + $0x98] sm:$0xff]
  %v2219 = vld [vmem:[#allocation2 + $0xa0] sm:$0xff]
  %v2220 = vld [vmem:[#allocation2 + $0xa8] sm:$0xff]
  %v2221 = vld [vmem:[#allocation2 + $0xb0] sm:$0xff]
  %v2222 = vld [vmem:[#allocation2 + $0xb8] sm:$0xff]
  %v2223 = vld [vmem:[%s4] sm:$0xf]
  %v2224 = vld [vmem:[%s4 + $0x4] sm:$0xf]
  %v2225 = vld [vmem:[%s4 + $0x8] sm:$0xf]
  %v2226 = vld [vmem:[%s4 + $0xc] sm:$0xf]
  %v2227 = vld [vmem:[%s4 + $0x10] sm:$0xf]
  %v2228 = vld [vmem:[%s4 + $0x14] sm:$0xf]
  %v2229 = vld [vmem:[%s4 + $0x18] sm:$0xf]
  %v2230 = vld [vmem:[%s4 + $0x1c] sm:$0xf]
  %v2231 = vld [vmem:[%s4 + $0x20] sm:$0xf]
  %v2232 = vld [vmem:[%s4 + $0x24] sm:$0xf]
  %v2233 = vld [vmem:[%s4 + $0x28] sm:$0xf]
  %v2234 = vld [vmem:[%s4 + $0x2c] sm:$0xf]
  %v2235 = vld [vmem:[%s4 + $0x30] sm:$0xf]
  %v2236 = vld [vmem:[%s4 + $0x34] sm:$0xf]
  %v2237 = vld [vmem:[%s4 + $0x38] sm:$0xf]
  %v2238 = vld [vmem:[%s4 + $0x3c] sm:$0xf]
  %v2239 = vld [vmem:[%s4 + $0x40] sm:$0xf]
  %v2240 = vld [vmem:[%s4 + $0x44] sm:$0xf]
  %v2241 = vld [vmem:[%s4 + $0x48] sm:$0xf]
  %v2242 = vld [vmem:[%s4 + $0x4c] sm:$0xf]
  %v2243 = vld [vmem:[%s4 + $0x50] sm:$0xf]
  %v2244 = vld [vmem:[%s4 + $0x54] sm:$0xf]
  %v2245 = vld [vmem:[%s4 + $0x58] sm:$0xf]
  %v2246 = vld [vmem:[%s4 + $0x5c] sm:$0xf]
  %v2247 = vld [vmem:[%s4 + $0x60] sm:$0xf]
  %v2248 = vld [vmem:[%s4 + $0x64] sm:$0xf]
  %v2249 = vld [vmem:[%s4 + $0x68] sm:$0xf]
  %v2250 = vld [vmem:[%s4 + $0x6c] sm:$0xf]
  %v2251 = vld [vmem:[%s4 + $0x70] sm:$0xf]
  %v2252 = vld [vmem:[%s4 + $0x74] sm:$0xf]
  %v2253 = vld [vmem:[%s4 + $0x78] sm:$0xf]
  %v2254 = vld [vmem:[%s4 + $0x7c] sm:$0xf]
  %v2255 = vld [vmem:[%s4 + $0x80] sm:$0xf]
  %v2256 = vld [vmem:[%s4 + $0x84] sm:$0xf]
  %v2257 = vld [vmem:[%s4 + $0x88] sm:$0xf]
  %v2258 = vld [vmem:[%s4 + $0x8c] sm:$0xf]
  %v2295 = vunpack.c.l.b16 %v2223
  %v2296 = vunpack.c.l.b16 %v2224
  %v2297 = vunpack.c.l.b16 %v2225
  %v2298 = vunpack.c.l.b16 %v2226
  %v2299 = vunpack.c.l.b16 %v2227
  %v2300 = vunpack.c.l.b16 %v2228
  %v2301 = vunpack.c.l.b16 %v2229
  %v2302 = vunpack.c.l.b16 %v2230
  %v2303 = vunpack.c.l.b16 %v2231
  %v2304 = vunpack.c.l.b16 %v2232
  %v2305 = vunpack.c.l.b16 %v2233
  %v2306 = vunpack.c.l.b16 %v2234
  %v2307 = vunpack.c.l.b16 %v2235
  %v2308 = vunpack.c.l.b16 %v2236
  %v2309 = vunpack.c.l.b16 %v2237
  %v2310 = vunpack.c.l.b16 %v2238
  %v2311 = vunpack.c.l.b16 %v2239
  %v2312 = vunpack.c.l.b16 %v2240
  %v2313 = vunpack.c.l.b16 %v2241
  %v2314 = vunpack.c.l.b16 %v2242
  %v2315 = vunpack.c.l.b16 %v2243
  %v2316 = vunpack.c.l.b16 %v2244
  %v2317 = vunpack.c.l.b16 %v2245
  %v2318 = vunpack.c.l.b16 %v2246
  %v2319 = vunpack.c.l.b16 %v2247
  %v2320 = vunpack.c.l.b16 %v2248
  %v2321 = vunpack.c.l.b16 %v2249
  %v2322 = vunpack.c.l.b16 %v2250
  %v2323 = vunpack.c.l.b16 %v2251
  %v2324 = vunpack.c.l.b16 %v2252
  %v2325 = vunpack.c.l.b16 %v2253
  %v2326 = vunpack.c.l.b16 %v2254
  %v2327 = vunpack.c.l.b16 %v2255
  %v2328 = vunpack.c.l.b16 %v2256
  %v2329 = vunpack.c.l.b16 %v2257
  %v2330 = vunpack.c.l.b16 %v2258
  %v2331 = vpack.c.b16 %v2296, %v2295
  %v2332 = vpack.c.b16 %v2298, %v2297
  %v2333 = vpack.c.b16 %v2300, %v2299
  %v2334 = vpack.c.b16 %v2302, %v2301
  %v2335 = vpack.c.b16 %v2304, %v2303
  %v2336 = vpack.c.b16 %v2306, %v2305
  %v2337 = vpack.c.b16 %v2308, %v2307
  %v2338 = vpack.c.b16 %v2310, %v2309
  %v2339 = vpack.c.b16 %v2312, %v2311
  %v2340 = vpack.c.b16 %v2314, %v2313
  %v2341 = vpack.c.b16 %v2316, %v2315
  %v2342 = vpack.c.b16 %v2318, %v2317
  %v2343 = vpack.c.b16 %v2320, %v2319
  %v2344 = vpack.c.b16 %v2322, %v2321
  %v2345 = vpack.c.b16 %v2324, %v2323
  %v2346 = vpack.c.b16 %v2326, %v2325
  %v2347 = vpack.c.b16 %v2328, %v2327
  %v2348 = vpack.c.b16 %v2330, %v2329
  %v2368 = vsel %vm108, %v2201, 0
  %v2371 = vsel %vm108, %v2204, 0
  %v2374 = vsel %vm108, %v2207, 0
  %v2377 = vsel %vm108, %v2210, 0
  %v2380 = vsel %vm108, %v2213, 0
  %v2383 = vsel %vm108, %v2216, 0
  %v2386 = vsel %vm108, %v2219, 0
  %v2389 = vsel %vm108, %v2222, 0
  %2391 = vmatprep.subr.bf16.mxu0 0
  %2392 = vmatpush1.bf16.msra.mxu0 %v2331
  %2393 = vmatprep.subr.bf16.mxu0 0
  %2394 = vmatpush1.bf16.msra.mxu0 %v2332
  %2395 = vmatprep.subr.bf16.mxu0 0
  %2396 = vmatpush1.bf16.msra.mxu0 %v2333
  %2397 = vmatprep.subr.bf16.mxu0 0
  %2398 = vmatpush1.bf16.msra.mxu0 %v2334
  %2399 = vmatprep.subr.bf16.mxu0 0
  %2400 = vmatpush1.bf16.msra.mxu0 %v2335
  %2401 = vmatprep.subr.bf16.mxu0 0
  %2402 = vmatpush1.bf16.msra.mxu0 %v2336
  %2403 = vmatprep.subr.bf16.mxu0 0
  %2404 = vmatpush1.bf16.msra.mxu0 %v2337
  %2405 = vmatprep.subr.bf16.mxu0 0
  %2406 = vmatpush1.bf16.msra.mxu0 %v2338
  %2407 = vmatprep.subr.bf16.mxu0 0
  %2408 = vmatpush1.bf16.msra.mxu0 %v2339
  %2409 = vmatprep.subr.bf16.mxu0 0
  %2410 = vmatpush1.bf16.msra.mxu0 %v2340
  %2411 = vmatprep.subr.bf16.mxu0 0
  %2412 = vmatpush1.bf16.msra.mxu0 %v2341
  %2413 = vmatprep.subr.bf16.mxu0 0
  %2414 = vmatpush1.bf16.msra.mxu0 %v2342
  %2415 = vmatprep.subr.bf16.mxu0 0
  %2416 = vmatpush1.bf16.msra.mxu0 %v2343
  %2417 = vmatprep.subr.bf16.mxu0 0
  %2418 = vmatpush1.bf16.msra.mxu0 %v2344
  %2419 = vmatprep.subr.bf16.mxu0 0
  %2420 = vmatpush1.bf16.msra.mxu0 %v2345
  %2421 = vmatprep.subr.bf16.mxu0 0
  %2422 = vmatpush1.bf16.msra.mxu0 %v2346
  %2423 = vmatprep.mubr.bf16.mxu0 %v2200
  %2424 = vmatmul.mubr.bf16.gmra.mrb[0].mxu0 %v2199
  %v2425 = vpop.f32.mrb[0].mxu0
  %v2426 = vadd.f32 0.0, %v2425
  %v2427 = vpop.f32.mrb[0].mxu0
  %v2428 = vpop.f32.mrb[0].mxu0
  %v2429 = vadd.f32 0.0, %v2428
  %v2430 = vpop.f32.mrb[0].mxu0
  %2431 = vmatprep.mubr.bf16.mxu0 %v2203
  %2432 = vmatmul.mubr.bf16.gmra.mrb[0].mxu0 %v2202
  %v2433 = vpop.f32.mrb[0].mxu0
  %v2434 = vadd.f32 0.0, %v2433
  %v2435 = vpop.f32.mrb[0].mxu0
  %v2436 = vpop.f32.mrb[0].mxu0
  %v2437 = vadd.f32 0.0, %v2436
  %v2438 = vpop.f32.mrb[0].mxu0
  %2439 = vmatprep.mubr.bf16.mxu0 %v2206
  %2440 = vmatmul.mubr.bf16.gmra.mrb[0].mxu0 %v2205
  %v2441 = vpop.f32.mrb[0].mxu0
  %v2442 = vadd.f32 0.0, %v2441
  %v2443 = vpop.f32.mrb[0].mxu0
  %v2444 = vpop.f32.mrb[0].mxu0
  %v2445 = vadd.f32 0.0, %v2444
  %v2446 = vpop.f32.mrb[0].mxu0
  %2447 = vmatprep.mubr.bf16.mxu0 %v2209
  %2448 = vmatmul.mubr.bf16.gmra.mrb[0].mxu0 %v2208
  %v2449 = vpop.f32.mrb[0].mxu0
  %v2450 = vadd.f32 0.0, %v2449
  %v2451 = vpop.f32.mrb[0].mxu0
  %v2452 = vpop.f32.mrb[0].mxu0
  %v2453 = vadd.f32 0.0, %v2452
  %v2454 = vpop.f32.mrb[0].mxu0
  %2455 = vmatprep.mubr.bf16.mxu0 %v2212
  %2456 = vmatmul.mubr.bf16.gmra.mrb[0].mxu0 %v2211
  %v2457 = vpop.f32.mrb[0].mxu0
  %v2458 = vadd.f32 0.0, %v2457
  %v2459 = vpop.f32.mrb[0].mxu0
  %v2460 = vpop.f32.mrb[0].mxu0
  %v2461 = vadd.f32 0.0, %v2460
  %v2462 = vpop.f32.mrb[0].mxu0
  %2463 = vmatprep.mubr.bf16.mxu0 %v2215
  %2464 = vmatmul.mubr.bf16.gmra.mrb[0].mxu0 %v2214
  %v2465 = vpop.f32.mrb[0].mxu0
  %v2466 = vadd.f32 0.0, %v2465
  %v2467 = vpop.f32.mrb[0].mxu0
  %v2468 = vpop.f32.mrb[0].mxu0
  %v2469 = vadd.f32 0.0, %v2468
  %v2470 = vpop.f32.mrb[0].mxu0
  %2471 = vmatprep.mubr.bf16.mxu0 %v2218
  %2472 = vmatmul.mubr.bf16.gmra.mrb[0].mxu0 %v2217
  %v2473 = vpop.f32.mrb[0].mxu0
  %v2474 = vadd.f32 0.0, %v2473
  %v2475 = vpop.f32.mrb[0].mxu0
  %v2476 = vpop.f32.mrb[0].mxu0
  %v2477 = vadd.f32 0.0, %v2476
  %v2478 = vpop.f32.mrb[0].mxu0
  %2479 = vmatprep.mubr.bf16.mxu0 %v2221
  %2480 = vmatmul.mubr.bf16.gmra.mrb[0].mxu0 %v2220
  %v2481 = vpop.f32.mrb[0].mxu0
  %v2482 = vadd.f32 0.0, %v2481
  %v2483 = vpop.f32.mrb[0].mxu0
  %v2484 = vpop.f32.mrb[0].mxu0
  %v2485 = vadd.f32 0.0, %v2484
  %v2486 = vpop.f32.mrb[0].mxu0
  %2487 = vdwg.mxu0
  %2488 = vmatprep.subr.bf16.mxu0 0
  %2489 = vmatpush1.bf16.msra.mxu0 %v2347
  %2490 = vmatprep.subr.bf16.mxu0 0
  %2491 = vmatpush1.bf16.msra.mxu0 %v2348
  %2492 = vmatprep.subr.bf16.mxu0 0
  %2493 = vmatpush1.bf16.msra.mxu0 0
  %2494 = vmatprep.subr.bf16.mxu0 0
  %2495 = vmatpush1.bf16.msra.mxu0 0
  %2496 = vmatprep.subr.bf16.mxu0 0
  %2497 = vmatpush1.bf16.msra.mxu0 0
  %2498 = vmatprep.subr.bf16.mxu0 0
  %2499 = vmatpush1.bf16.msra.mxu0 0
  %2500 = vmatprep.subr.bf16.mxu0 0
  %2501 = vmatpush1.bf16.msra.mxu0 0
  %2502 = vmatprep.subr.bf16.mxu0 0
  %2503 = vmatpush1.bf16.msra.mxu0 0
  %2504 = vmatprep.subr.bf16.mxu0 0
  %2505 = vmatpush1.bf16.msra.mxu0 0
  %2506 = vmatprep.subr.bf16.mxu0 0
  %2507 = vmatpush1.bf16.msra.mxu0 0
  %2508 = vmatprep.subr.bf16.mxu0 0
  %2509 = vmatpush1.bf16.msra.mxu0 0
  %2510 = vmatprep.subr.bf16.mxu0 0
  %2511 = vmatpush1.bf16.msra.mxu0 0
  %2512 = vmatprep.subr.bf16.mxu0 0
  %2513 = vmatpush1.bf16.msra.mxu0 0
  %2514 = vmatprep.subr.bf16.mxu0 0
  %2515 = vmatpush1.bf16.msra.mxu0 0
  %2516 = vmatprep.subr.bf16.mxu0 0
  %2517 = vmatpush1.bf16.msra.mxu0 0
  %2518 = vmatprep.subr.bf16.mxu0 0
  %2519 = vmatpush1.bf16.msra.mxu0 0
  %2520 = vmatprep.mubr.bf16.mxu0 0
  %2521 = vmatmul.mubr.bf16.gmra.mrb[0].mxu0 %v2368
  %v2522 = vpop.f32.mrb[0].mxu0
  %v2523 = vadd.f32 %v2426, %v2522
  %v2524 = vpop.f32.mrb[0].mxu0
  %v2525 = vpop.f32.mrb[0].mxu0
  %v2526 = vadd.f32 %v2429, %v2525
  %v2527 = vpop.f32.mrb[0].mxu0
  %2528 = vmatprep.mubr.bf16.mxu0 0
  %2529 = vmatmul.mubr.bf16.gmra.mrb[0].mxu0 %v2371
  %v2530 = vpop.f32.mrb[0].mxu0
  %v2531 = vadd.f32 %v2434, %v2530
  %v2532 = vpop.f32.mrb[0].mxu0
  %v2533 = vpop.f32.mrb[0].mxu0
  %v2534 = vadd.f32 %v2437, %v2533
  %v2535 = vpop.f32.mrb[0].mxu0
  %2536 = vmatprep.mubr.bf16.mxu0 0
  %2537 = vmatmul.mubr.bf16.gmra.mrb[0].mxu0 %v2374
  %v2538 = vpop.f32.mrb[0].mxu0
  %v2539 = vadd.f32 %v2442, %v2538
  %v2540 = vpop.f32.mrb[0].mxu0
  %v2541 = vpop.f32.mrb[0].mxu0
  %v2542 = vadd.f32 %v2445, %v2541
  %v2543 = vpop.f32.mrb[0].mxu0
  %2544 = vmatprep.mubr.bf16.mxu0 0
  %2545 = vmatmul.mubr.bf16.gmra.mrb[0].mxu0 %v2377
  %v2546 = vpop.f32.mrb[0].mxu0
  %v2547 = vadd.f32 %v2450, %v2546
  %v2548 = vpop.f32.mrb[0].mxu0
  %v2549 = vpop.f32.mrb[0].mxu0
  %v2550 = vadd.f32 %v2453, %v2549
  %v2551 = vpop.f32.mrb[0].mxu0
  %2552 = vmatprep.mubr.bf16.mxu0 0
  %2553 = vmatmul.mubr.bf16.gmra.mrb[0].mxu0 %v2380
  %v2554 = vpop.f32.mrb[0].mxu0
  %v2555 = vadd.f32 %v2458, %v2554
  %v2556 = vpop.f32.mrb[0].mxu0
  %v2557 = vpop.f32.mrb[0].mxu0
  %v2558 = vadd.f32 %v2461, %v2557
  %v2559 = vpop.f32.mrb[0].mxu0
  %2560 = vmatprep.mubr.bf16.mxu0 0
  %2561 = vmatmul.mubr.bf16.gmra.mrb[0].mxu0 %v2383
  %v2562 = vpop.f32.mrb[0].mxu0
  %v2563 = vadd.f32 %v2466, %v2562
  %v2564 = vpop.f32.mrb[0].mxu0
  %v2565 = vpop.f32.mrb[0].mxu0
  %v2566 = vadd.f32 %v2469, %v2565
  %v2567 = vpop.f32.mrb[0].mxu0
  %2568 = vmatprep.mubr.bf16.mxu0 0
  %2569 = vmatmul.mubr.bf16.gmra.mrb[0].mxu0 %v2386
  %v2570 = vpop.f32.mrb[0].mxu0
  %v2571 = vadd.f32 %v2474, %v2570
  %v2572 = vpop.f32.mrb[0].mxu0
  %v2573 = vpop.f32.mrb[0].mxu0
  %v2574 = vadd.f32 %v2477, %v2573
  %v2575 = vpop.f32.mrb[0].mxu0
  %2576 = vmatprep.mubr.bf16.mxu0 0
  %2577 = vmatmul.mubr.bf16.gmra.mrb[0].mxu0 %v2389
  %v2578 = vpop.f32.mrb[0].mxu0
  %v2579 = vadd.f32 %v2482, %v2578
  %v2580 = vpop.f32.mrb[0].mxu0
  %v2581 = vpop.f32.mrb[0].mxu0
  %v2582 = vadd.f32 %v2485, %v2581
  %v2583 = vpop.f32.mrb[0].mxu0
  %2584 = vdwg.mxu0
  %v2585 = vmax.f32 %v2523, %v2539
  %v2586 = vmax.f32 %v2526, %v2542
  %v2587 = vmax.f32 %v2531, %v2547
  %v2588 = vmax.f32 %v2534, %v2550
  %v2589 = vmax.f32 %v2555, %v2571
  %v2590 = vmax.f32 %v2558, %v2574
  %v2591 = vmax.f32 %v2563, %v2579
  %v2592 = vmax.f32 %v2566, %v2582
  %v2593 = vmax.f32 %v2585, %v2589
  %v2594 = vmax.f32 %v2586, %v2590
  %v2595 = vmax.f32 %v2587, %v2591
  %v2596 = vmax.f32 %v2588, %v2592
  %v2597 = vld [vmem:[%s5] sm:$0x1]
  %v2599 = vlaneseq
  %v2600 = vshrl.u32 %v2599, 7
  %v2601 = vsub.s32 0, %v2600
  %v2602 = vrot.slane %v2597, %v2601
  %v2604 = vadd.f32 %v2593, %v2602
  %v2605 = vadd.f32 %v2594, %v2602
  %v2606 = vadd.f32 %v2595, %v2602
  %v2607 = vadd.f32 %v2596, %v2602
  %v2608 = vmax.f32 %v2604, 0.0
  %v2609 = vmax.f32 %v2605, 0.0
  %v2610 = vmax.f32 %v2606, 0.0
  %v2611 = vmax.f32 %v2607, 0.0
  %v2612 = vpack.c.bf16 %v2609, %v2608
  %v2613 = vpack.c.bf16 %v2611, %v2610
  %vm2614 = vcmask 519168
  %2615 = vst.msk [vmem:[#allocation3] sm:$0xf] %vm2614, %v2612
  %v2617 = vunpack.c.h.b16 %v2612
  %v2618 = vpack.c.b16 %v2617, %v2617
  %2619 = vrot.lane.b32.xlu0 %v2618, 64
  %v2620 = vpop.permute.xlu0 %2619
  %vm2622 = vcmask 1043968
  %2623 = vst.msk [vmem:[#allocation3] sm:$0xf] %vm2622, %v2620
  %2624 = vst.msk [vmem:[#allocation3 + $0x4] sm:$0xf] %vm2614, %v2613
  %v2626 = vunpack.c.h.b16 %v2613
  %v2627 = vpack.c.b16 %v2626, %v2626
  %2628 = vrot.lane.b32.xlu0 %v2627, 64
  %v2629 = vpop.permute.xlu0 %2628
  %2631 = vst.msk [vmem:[#allocation3 + $0x4] sm:$0xf] %vm2622, %v2629
  %v2632 = vld [vmem:[#allocation3] sm:$0xff]
  %v2633 = vld [vmem:[%s6] sm:$0xf]
  %v2634 = vld [vmem:[%s6 + $0x4] sm:$0xf]
  %v2635 = vld [vmem:[%s6 + $0x8] sm:$0xf]
  %v2636 = vld [vmem:[%s6 + $0xc] sm:$0xf]
  %v2637 = vld [vmem:[%s6 + $0x10] sm:$0xf]
  %v2638 = vld [vmem:[%s6 + $0x14] sm:$0xf]
  %v2639 = vld [vmem:[%s6 + $0x18] sm:$0xf]
  %v2640 = vld [vmem:[%s6 + $0x1c] sm:$0xf]
  %v2641 = vld [vmem:[%s6 + $0x20] sm:$0xf]
  %v2642 = vld [vmem:[%s6 + $0x24] sm:$0xf]
  %v2643 = vld [vmem:[%s6 + $0x28] sm:$0xf]
  %v2644 = vld [vmem:[%s6 + $0x2c] sm:$0xf]
  %v2645 = vld [vmem:[%s6 + $0x30] sm:$0xf]
  %v2646 = vld [vmem:[%s6 + $0x34] sm:$0xf]
  %v2647 = vld [vmem:[%s6 + $0x38] sm:$0xf]
  %v2648 = vld [vmem:[%s6 + $0x3c] sm:$0xf]
  %v2649 = vld [vmem:[%s6 + $0x40] sm:$0xf]
  %v2650 = vld [vmem:[%s6 + $0x44] sm:$0xf]
  %v2651 = vld [vmem:[%s6 + $0x48] sm:$0xf]
  %v2652 = vld [vmem:[%s6 + $0x4c] sm:$0xf]
  %v2653 = vld [vmem:[%s6 + $0x50] sm:$0xf]
  %v2654 = vld [vmem:[%s6 + $0x54] sm:$0xf]
  %v2655 = vld [vmem:[%s6 + $0x58] sm:$0xf]
  %v2656 = vld [vmem:[%s6 + $0x5c] sm:$0xf]
  %v2657 = vld [vmem:[%s6 + $0x60] sm:$0xf]
  %v2658 = vld [vmem:[%s6 + $0x64] sm:$0xf]
  %v2659 = vld [vmem:[%s6 + $0x68] sm:$0xf]
  %v2660 = vld [vmem:[%s6 + $0x6c] sm:$0xf]
  %v2661 = vld [vmem:[%s6 + $0x70] sm:$0xf]
  %v2662 = vld [vmem:[%s6 + $0x74] sm:$0xf]
  %v2663 = vld [vmem:[%s6 + $0x78] sm:$0xf]
  %v2664 = vld [vmem:[%s6 + $0x7c] sm:$0xf]
  %v2665 = vld [vmem:[%s7] sm:$0x1]
  %v2667 = vlaneseq
  %v2668 = vshrl.u32 %v2667, 7
  %v2669 = vsub.s32 0, %v2668
  %v2670 = vrot.slane %v2665, %v2669
  %v2673 = vunpack.c.l.b16 %v2632
  %v2674 = vunpack.c.h.b16 %v2632
  %v2675 = vpack.c.b16 %v2673, %v2673
  %v2676 = vpack.c.b16 %v2674, %v2674
  %v2711 = vunpack.c.l.b16 %v2633
  %v2712 = vunpack.c.l.b16 %v2634
  %v2713 = vunpack.c.l.b16 %v2635
  %v2714 = vunpack.c.l.b16 %v2636
  %v2715 = vunpack.c.l.b16 %v2637
  %v2716 = vunpack.c.l.b16 %v2638
  %v2717 = vunpack.c.l.b16 %v2639
  %v2718 = vunpack.c.l.b16 %v2640
  %v2719 = vunpack.c.l.b16 %v2641
  %v2720 = vunpack.c.l.b16 %v2642
  %v2721 = vunpack.c.l.b16 %v2643
  %v2722 = vunpack.c.l.b16 %v2644
  %v2723 = vunpack.c.l.b16 %v2645
  %v2724 = vunpack.c.l.b16 %v2646
  %v2725 = vunpack.c.l.b16 %v2647
  %v2726 = vunpack.c.l.b16 %v2648
  %v2727 = vunpack.c.l.b16 %v2649
  %v2728 = vunpack.c.l.b16 %v2650
  %v2729 = vunpack.c.l.b16 %v2651
  %v2730 = vunpack.c.l.b16 %v2652
  %v2731 = vunpack.c.l.b16 %v2653
  %v2732 = vunpack.c.l.b16 %v2654
  %v2733 = vunpack.c.l.b16 %v2655
  %v2734 = vunpack.c.l.b16 %v2656
  %v2735 = vunpack.c.l.b16 %v2657
  %v2736 = vunpack.c.l.b16 %v2658
  %v2737 = vunpack.c.l.b16 %v2659
  %v2738 = vunpack.c.l.b16 %v2660
  %v2739 = vunpack.c.l.b16 %v2661
  %v2740 = vunpack.c.l.b16 %v2662
  %v2741 = vunpack.c.l.b16 %v2663
  %v2742 = vunpack.c.l.b16 %v2664
  %v2743 = vpack.c.b16 %v2712, %v2711
  %v2744 = vpack.c.b16 %v2714, %v2713
  %v2745 = vpack.c.b16 %v2716, %v2715
  %v2746 = vpack.c.b16 %v2718, %v2717
  %v2747 = vpack.c.b16 %v2720, %v2719
  %v2748 = vpack.c.b16 %v2722, %v2721
  %v2749 = vpack.c.b16 %v2724, %v2723
  %v2750 = vpack.c.b16 %v2726, %v2725
  %v2751 = vpack.c.b16 %v2728, %v2727
  %v2752 = vpack.c.b16 %v2730, %v2729
  %v2753 = vpack.c.b16 %v2732, %v2731
  %v2754 = vpack.c.b16 %v2734, %v2733
  %v2755 = vpack.c.b16 %v2736, %v2735
  %v2756 = vpack.c.b16 %v2738, %v2737
  %v2757 = vpack.c.b16 %v2740, %v2739
  %v2758 = vpack.c.b16 %v2742, %v2741
  %2775 = vmatprep.subr.bf16.mxu0 0
  %2776 = vmatpush1.bf16.msra.mxu0 %v2743
  %2777 = vmatprep.subr.bf16.mxu0 0
  %2778 = vmatpush1.bf16.msra.mxu0 %v2744
  %2779 = vmatprep.subr.bf16.mxu0 0
  %2780 = vmatpush1.bf16.msra.mxu0 %v2745
  %2781 = vmatprep.subr.bf16.mxu0 0
  %2782 = vmatpush1.bf16.msra.mxu0 %v2746
  %2783 = vmatprep.subr.bf16.mxu0 0
  %2784 = vmatpush1.bf16.msra.mxu0 %v2747
  %2785 = vmatprep.subr.bf16.mxu0 0
  %2786 = vmatpush1.bf16.msra.mxu0 %v2748
  %2787 = vmatprep.subr.bf16.mxu0 0
  %2788 = vmatpush1.bf16.msra.mxu0 %v2749
  %2789 = vmatprep.subr.bf16.mxu0 0
  %2790 = vmatpush1.bf16.msra.mxu0 %v2750
  %2791 = vmatprep.subr.bf16.mxu0 0
  %2792 = vmatpush1.bf16.msra.mxu0 %v2751
  %2793 = vmatprep.subr.bf16.mxu0 0
  %2794 = vmatpush1.bf16.msra.mxu0 %v2752
  %2795 = vmatprep.subr.bf16.mxu0 0
  %2796 = vmatpush1.bf16.msra.mxu0 %v2753
  %2797 = vmatprep.subr.bf16.mxu0 0
  %2798 = vmatpush1.bf16.msra.mxu0 %v2754
  %2799 = vmatprep.subr.bf16.mxu0 0
  %2800 = vmatpush1.bf16.msra.mxu0 %v2755
  %2801 = vmatprep.subr.bf16.mxu0 0
  %2802 = vmatpush1.bf16.msra.mxu0 %v2756
  %2803 = vmatprep.subr.bf16.mxu0 0
  %2804 = vmatpush1.bf16.msra.mxu0 %v2757
  %2805 = vmatprep.subr.bf16.mxu0 0
  %2806 = vmatpush1.bf16.msra.mxu0 %v2758
  %2807 = vmatprep.mubr.bf16.mxu0 %v2676
  %2808 = vmatmul.mubr.bf16.gmra.mrb[0].mxu0 %v2675
  %v2809 = vpop.f32.mrb[0].mxu0
  %v2810 = vadd.f32 %v2670, %v2809
  %v2811 = vpop.f32.mrb[0].mxu0
  %v2812 = vpop.f32.mrb[0].mxu0
  %v2813 = vpop.f32.mrb[0].mxu0
  %2814 = vdwg.mxu0
  %v2815 = vmax.f32 %v2810, 0.0
  %v2816 = vpack.c.bf16 %v2815, %v2815
  %v2817 = vld [vmem:[%s8] sm:$0xf]
  %v2818 = vld [vmem:[%s8 + $0x4] sm:$0xf]
  %v2819 = vld [vmem:[%s8 + $0x8] sm:$0xf]
  %v2820 = vld [vmem:[%s8 + $0xc] sm:$0xf]
  %v2821 = vld [vmem:[%s8 + $0x10] sm:$0xf]
  %v2822 = vld [vmem:[%s8 + $0x14] sm:$0xf]
  %v2823 = vld [vmem:[%s8 + $0x18] sm:$0xf]
  %v2824 = vld [vmem:[%s8 + $0x1c] sm:$0xf]
  %v2825 = vld [vmem:[%s8 + $0x20] sm:$0xf]
  %v2826 = vld [vmem:[%s8 + $0x24] sm:$0xf]
  %v2827 = vld [vmem:[%s8 + $0x28] sm:$0xf]
  %v2828 = vld [vmem:[%s8 + $0x2c] sm:$0xf]
  %v2829 = vld [vmem:[%s8 + $0x30] sm:$0xf]
  %v2830 = vld [vmem:[%s8 + $0x34] sm:$0xf]
  %v2831 = vld [vmem:[%s8 + $0x38] sm:$0xf]
  %v2832 = vld [vmem:[%s8 + $0x3c] sm:$0xf]
  %v2833 = vld [vmem:[%s9] sm:$0x1]
  %v2835 = vlaneseq
  %v2836 = vshrl.u32 %v2835, 7
  %v2837 = vsub.s32 0, %v2836
  %v2838 = vrot.slane %v2833, %v2837
  %v2856 = vunpack.c.l.b16 %v2817
  %v2857 = vunpack.c.l.b16 %v2818
  %v2858 = vunpack.c.l.b16 %v2819
  %v2859 = vunpack.c.l.b16 %v2820
  %v2860 = vunpack.c.l.b16 %v2821
  %v2861 = vunpack.c.l.b16 %v2822
  %v2862 = vunpack.c.l.b16 %v2823
  %v2863 = vunpack.c.l.b16 %v2824
  %v2864 = vunpack.c.l.b16 %v2825
  %v2865 = vunpack.c.l.b16 %v2826
  %v2866 = vunpack.c.l.b16 %v2827
  %v2867 = vunpack.c.l.b16 %v2828
  %v2868 = vunpack.c.l.b16 %v2829
  %v2869 = vunpack.c.l.b16 %v2830
  %v2870 = vunpack.c.l.b16 %v2831
  %v2871 = vunpack.c.l.b16 %v2832
  %v2872 = vpack.c.b16 %v2857, %v2856
  %v2873 = vpack.c.b16 %v2859, %v2858
  %v2874 = vpack.c.b16 %v2861, %v2860
  %v2875 = vpack.c.b16 %v2863, %v2862
  %v2876 = vpack.c.b16 %v2865, %v2864
  %v2877 = vpack.c.b16 %v2867, %v2866
  %v2878 = vpack.c.b16 %v2869, %v2868
  %v2879 = vpack.c.b16 %v2871, %v2870
  %2888 = vmatprep.subr.bf16.mxu0 0
  %2889 = vmatpush1.bf16.msra.mxu0 %v2872
  %2890 = vmatprep.subr.bf16.mxu0 0
  %2891 = vmatpush1.bf16.msra.mxu0 %v2873
  %2892 = vmatprep.subr.bf16.mxu0 0
  %2893 = vmatpush1.bf16.msra.mxu0 %v2874
  %2894 = vmatprep.subr.bf16.mxu0 0
  %2895 = vmatpush1.bf16.msra.mxu0 %v2875
  %2896 = vmatprep.subr.bf16.mxu0 0
  %2897 = vmatpush1.bf16.msra.mxu0 %v2876
  %2898 = vmatprep.subr.bf16.mxu0 0
  %2899 = vmatpush1.bf16.msra.mxu0 %v2877
  %2900 = vmatprep.subr.bf16.mxu0 0
  %2901 = vmatpush1.bf16.msra.mxu0 %v2878
  %2902 = vmatprep.subr.bf16.mxu0 0
  %2903 = vmatpush1.bf16.msra.mxu0 %v2879
  %2904 = vmatprep.subr.bf16.mxu0 0
  %2905 = vmatpush1.bf16.msra.mxu0 0
  %2906 = vmatprep.subr.bf16.mxu0 0
  %2907 = vmatpush1.bf16.msra.mxu0 0
  %2908 = vmatprep.subr.bf16.mxu0 0
  %2909 = vmatpush1.bf16.msra.mxu0 0
  %2910 = vmatprep.subr.bf16.mxu0 0
  %2911 = vmatpush1.bf16.msra.mxu0 0
  %2912 = vmatprep.subr.bf16.mxu0 0
  %2913 = vmatpush1.bf16.msra.mxu0 0
  %2914 = vmatprep.subr.bf16.mxu0 0
  %2915 = vmatpush1.bf16.msra.mxu0 0
  %2916 = vmatprep.subr.bf16.mxu0 0
  %2917 = vmatpush1.bf16.msra.mxu0 0
  %2918 = vmatprep.subr.bf16.mxu0 0
  %2919 = vmatpush1.bf16.msra.mxu0 0
  %2920 = vmatprep.mubr.bf16.mxu0 0
  %2921 = vmatmul.mubr.bf16.gmra.mrb[0].mxu0 %v2816
  %v2922 = vpop.f32.mrb[0].mxu0
  %v2923 = vadd.f32 %v2838, %v2922
  %v2924 = vpop.f32.mrb[0].mxu0
  %v2925 = vpop.f32.mrb[0].mxu0
  %v2926 = vpop.f32.mrb[0].mxu0
  %2927 = vdwg.mxu0
  %2928 = vst [vmem:[%s10] sm:$0xff] %v2923
  // Predicated region
  $region42: #{proj2cnn_forward.1} parent=0 // pred_check
    _
  $region43: #{proj2cnn_forward.1} parent=0 // pred_check_branch
    %2930 = sbr.rel (0) target = $region45
  $region44: #{proj2cnn_forward.1} parent=0 // pred_region
    _
  $region45: #{proj2cnn_forward.1} parent=0 // pred_fallthru
    _
  // Predicated region
  $region46: #{proj2cnn_forward.1} parent=0 // pred_check
    _
  $region47: #{proj2cnn_forward.1} parent=0 // pred_check_branch
    %2932 = sbr.rel (0) target = $region49
  $region48: #{proj2cnn_forward.1} parent=0 // pred_region
    _
  $region49: #{proj2cnn_forward.1} parent=0 // pred_fallthru
    _

</llo_original>
